<compile_context>
chip_gen: v5e
topology: v5e:2x2
jax: 0.10.0
libtpu: 0.0.40
codegen_flags: <defaults>
</compile_context>

<pallas_src>
import jax
import jax.numpy as jnp
from jax.experimental import pallas as pl
from jax.experimental.pallas import tpu as pltpu


def _make_kernel(C, H, W, K):
    P = K // 2

    def kernel(x_ref, w_ref, o_ref, pad_ref):
        # x_ref:   (1, C, H, W)        VMEM  one batch slab
        # w_ref:   (2*K*K,)            SMEM  conv weights, OIHW flattened
        # o_ref:   (1, 1, H, W)        VMEM
        # pad_ref: (2, H+2P, W+2P)     VMEM scratch (zero-padded avg/max maps)
        x = x_ref[0]                       # (C, H, W)

        # ---- channel-wise squeeze: mean & max over C (major-axis reduction) ----
        avg = jnp.mean(x, axis=0)          # (H, W)
        mx = jnp.max(x, axis=0)            # (H, W)

        # ---- build zero-padded 2-channel feature map in scratch ----
        pad_ref[...] = jnp.zeros_like(pad_ref)
        pad_ref[0, P:P + H, P:P + W] = avg
        pad_ref[1, P:P + H, P:P + W] = mx

        # ---- KxK conv (2 -> 1 channels), fully unrolled shift+accumulate ----
        acc = jnp.zeros((H, W), jnp.float32)
        for ci in range(2):
            for dy in range(K):
                for dx in range(K):
                    wv = w_ref[ci * K * K + dy * K + dx]           # SMEM scalar
                    acc = acc + wv * pad_ref[ci, dy:dy + H, dx:dx + W]

        o_ref[0, 0] = jax.nn.sigmoid(acc)

    return kernel


def spatial_attention_forward(x, w):
    """x: (B, C, H, W) f32.  w: (1, 2, K, K) f32 conv weight (OIHW, no bias)."""
    B, C, H, W = x.shape
    K = w.shape[-1]
    P = K // 2

    kernel = _make_kernel(C, H, W, K)
    w_flat = w.reshape(-1)                 # (2*K*K,) scalar table for SMEM

    out = pl.pallas_call(
        kernel,
        out_shape=jax.ShapeDtypeStruct((B, 1, H, W), x.dtype),
        grid=(B,),
        in_specs=[
            pl.BlockSpec((1, C, H, W), lambda b: (b, 0, 0, 0)),
            pl.BlockSpec(memory_space=pltpu.MemorySpace.SMEM),
        ],
        out_specs=pl.BlockSpec((1, 1, H, W), lambda b: (b, 0, 0, 0)),
        scratch_shapes=[pltpu.VMEM((2, H + 2 * P, W + 2 * P), jnp.float32)],
        compiler_params=pltpu.CompilerParams(
            dimension_semantics=("parallel",)),
    )(x, w_flat)
    return out


def _ref_spatial_attention(x, w):
    """Pure-JAX reference mirroring the PyTorch forward."""
    avg = jnp.mean(x, axis=1, keepdims=True)
    mx = jnp.max(x, axis=1, keepdims=True)
    f = jnp.concatenate([avg, mx], axis=1)          # (B, 2, H, W)
    P = w.shape[-1] // 2
    y = jax.lax.conv_general_dilated(
        f, w, window_strides=(1, 1), padding=((P, P), (P, P)),
        dimension_numbers=("NCHW", "OIHW", "NCHW"))
    return jax.nn.sigmoid(y)


if __name__ == "__main__":
    B, C, H, W = 2, 4, 16, 16
    K = 7                                  # kernel_size=7 (default), padding=3

    key = jax.random.PRNGKey(0)
    kx, kw = jax.random.split(key)
    x = jax.random.normal(kx, (B, C, H, W), dtype=jnp.float32)

    # nn.Conv2d(2, 1, K, bias=False) weight, shape (1, 2, K, K),
    # ~ U(-1/sqrt(fan_in), 1/sqrt(fan_in)) with fan_in = 2*K*K.
    bound = 1.0 / ((2 * K * K) ** 0.5)
    w = jax.random.uniform(kw, (1, 2, K, K), jnp.float32, -bound, bound)

    out = spatial_attention_forward(x, w)
    jax.block_until_ready(out)

    ref = _ref_spatial_attention(x, w)
    assert out.shape == (B, 1, H, W)
    assert jnp.allclose(out, ref, atol=1e-5, rtol=1e-5), "mismatch vs reference"

    print("KERNEL_OK")
</pallas_src>

<mosaic_0001>
module attributes {stable_mosaic.version = 11 : i64} {
  func.func @kernel(%arg0: i32, %arg1: memref<1x4x16x16xf32, #tpu.memory_space<vmem>>, %arg2: memref<98xf32, #tpu.memory_space<smem>>, %arg3: memref<1x1x16x16xf32, #tpu.memory_space<vmem>>, %arg4: memref<2x22x22xf32, #tpu.memory_space<vmem>>) attributes {dimension_semantics = [#tpu.dimension_semantics<parallel>], iteration_bounds = array<i64: 2>, scalar_prefetch = 0 : i64, scratch_operands = 1 : i64, tpu.core_type = #tpu.core_type<tc>, window_params = [{transform_indices = @transform_0, window_bounds = array<i64: 1, 4, 16, 16>}, {transform_indices = @transform_1, window_bounds = array<i64: 98>}, {transform_indices = @transform_2, window_bounds = array<i64: 1, 1, 16, 16>}]} {
    %c0 = arith.constant 0 : index
    %c0_0 = arith.constant 0 : index
    %c0_1 = arith.constant 0 : index
    %c0_2 = arith.constant 0 : index
    %0 = vector.load %arg1[%c0, %c0_0, %c0_1, %c0_2] : memref<1x4x16x16xf32, #tpu.memory_space<vmem>>, vector<1x4x16x16xf32>
    %1 = vector.shape_cast %0 : vector<1x4x16x16xf32> to vector<4x16x16xf32>
    %cst = arith.constant dense<0.000000e+00> : vector<16x16xf32>
    %2 = vector.multi_reduction <add>, %1, %cst [0] : vector<4x16x16xf32> to vector<16x16xf32>
    %cst_3 = arith.constant 4.000000e+00 : f32
    %3 = vector.broadcast %cst_3 : f32 to vector<16x16xf32>
    %4 = arith.divf %2, %3 : vector<16x16xf32>
    %cst_4 = arith.constant dense<0xFF800000> : vector<16x16xf32>
    %5 = vector.multi_reduction <maximumf>, %1, %cst_4 [0] : vector<4x16x16xf32> to vector<16x16xf32>
    %cst_5 = arith.constant 0.000000e+00 : f32
    %6 = vector.broadcast %cst_5 : f32 to vector<2x22x22xf32>
    %c0_6 = arith.constant 0 : index
    %c0_7 = arith.constant 0 : index
    %c0_8 = arith.constant 0 : index
    %7 = vector.load %arg4[%c0_6, %c0_7, %c0_8] : memref<2x22x22xf32, #tpu.memory_space<vmem>>, vector<2x22x22xf32>
    tpu.vector_store %arg4[%c0_6, %c0_7, %c0_8], %6 {strides = array<i32>} : memref<2x22x22xf32, #tpu.memory_space<vmem>>, vector<2x22x22xf32>,
    %c0_9 = arith.constant 0 : index
    %c3 = arith.constant 3 : index
    %c3_10 = arith.constant 3 : index
    %8 = vector.load %arg4[%c0_9, %c3, %c3_10] : memref<2x22x22xf32, #tpu.memory_space<vmem>>, vector<1x16x16xf32>
    %9 = vector.shape_cast %8 : vector<1x16x16xf32> to vector<16x16xf32>
    %10 = vector.shape_cast %4 : vector<16x16xf32> to vector<1x16x16xf32>
    tpu.vector_store %arg4[%c0_9, %c3, %c3_10], %10 {strides = array<i32>} : memref<2x22x22xf32, #tpu.memory_space<vmem>>, vector<1x16x16xf32>,
    %c1 = arith.constant 1 : index
    %c3_11 = arith.constant 3 : index
    %c3_12 = arith.constant 3 : index
    %11 = vector.load %arg4[%c1, %c3_11, %c3_12] : memref<2x22x22xf32, #tpu.memory_space<vmem>>, vector<1x16x16xf32>
    %12 = vector.shape_cast %11 : vector<1x16x16xf32> to vector<16x16xf32>
    %13 = vector.shape_cast %5 : vector<16x16xf32> to vector<1x16x16xf32>
    tpu.vector_store %arg4[%c1, %c3_11, %c3_12], %13 {strides = array<i32>} : memref<2x22x22xf32, #tpu.memory_space<vmem>>, vector<1x16x16xf32>,
    %cst_13 = arith.constant 0.000000e+00 : f32
    %14 = vector.broadcast %cst_13 : f32 to vector<16x16xf32>
    %c0_14 = arith.constant 0 : index
    %15 = memref.load %arg2[%c0_14] : memref<98xf32, #tpu.memory_space<smem>>
    %c0_15 = arith.constant 0 : index
    %c0_16 = arith.constant 0 : index
    %c0_17 = arith.constant 0 : index
    %16 = vector.load %arg4[%c0_15, %c0_16, %c0_17] : memref<2x22x22xf32, #tpu.memory_space<vmem>>, vector<1x16x16xf32>
    %17 = vector.shape_cast %16 : vector<1x16x16xf32> to vector<16x16xf32>
    %18 = vector.broadcast %15 : f32 to vector<16x16xf32>
    %19 = arith.mulf %18, %17 : vector<16x16xf32>
    %20 = arith.addf %14, %19 : vector<16x16xf32>
    %c1_18 = arith.constant 1 : index
    %21 = memref.load %arg2[%c1_18] : memref<98xf32, #tpu.memory_space<smem>>
    %c0_19 = arith.constant 0 : index
    %c0_20 = arith.constant 0 : index
    %c1_21 = arith.constant 1 : index
    %22 = vector.load %arg4[%c0_19, %c0_20, %c1_21] : memref<2x22x22xf32, #tpu.memory_space<vmem>>, vector<1x16x16xf32>
    %23 = vector.shape_cast %22 : vector<1x16x16xf32> to vector<16x16xf32>
    %24 = vector.broadcast %21 : f32 to vector<16x16xf32>
    %25 = arith.mulf %24, %23 : vector<16x16xf32>
    %26 = arith.addf %20, %25 : vector<16x16xf32>
    %c2 = arith.constant 2 : index
    %27 = memref.load %arg2[%c2] : memref<98xf32, #tpu.memory_space<smem>>
    %c0_22 = arith.constant 0 : index
    %c0_23 = arith.constant 0 : index
    %c2_24 = arith.constant 2 : index
    %28 = vector.load %arg4[%c0_22, %c0_23, %c2_24] : memref<2x22x22xf32, #tpu.memory_space<vmem>>, vector<1x16x16xf32>
    %29 = vector.shape_cast %28 : vector<1x16x16xf32> to vector<16x16xf32>
    %30 = vector.broadcast %27 : f32 to vector<16x16xf32>
    %31 = arith.mulf %30, %29 : vector<16x16xf32>
    %32 = arith.addf %26, %31 : vector<16x16xf32>
    %c3_25 = arith.constant 3 : index
    %33 = memref.load %arg2[%c3_25] : memref<98xf32, #tpu.memory_space<smem>>
    %c0_26 = arith.constant 0 : index
    %c0_27 = arith.constant 0 : index
    %c3_28 = arith.constant 3 : index
    %34 = vector.load %arg4[%c0_26, %c0_27, %c3_28] : memref<2x22x22xf32, #tpu.memory_space<vmem>>, vector<1x16x16xf32>
    %35 = vector.shape_cast %34 : vector<1x16x16xf32> to vector<16x16xf32>
    %36 = vector.broadcast %33 : f32 to vector<16x16xf32>
    %37 = arith.mulf %36, %35 : vector<16x16xf32>
    %38 = arith.addf %32, %37 : vector<16x16xf32>
    %c4 = arith.constant 4 : index
    %39 = memref.load %arg2[%c4] : memref<98xf32, #tpu.memory_space<smem>>
    %c0_29 = arith.constant 0 : index
    %c0_30 = arith.constant 0 : index
    %c4_31 = arith.constant 4 : index
    %40 = vector.load %arg4[%c0_29, %c0_30, %c4_31] : memref<2x22x22xf32, #tpu.memory_space<vmem>>, vector<1x16x16xf32>
    %41 = vector.shape_cast %40 : vector<1x16x16xf32> to vector<16x16xf32>
    %42 = vector.broadcast %39 : f32 to vector<16x16xf32>
    %43 = arith.mulf %42, %41 : vector<16x16xf32>
    %44 = arith.addf %38, %43 : vector<16x16xf32>
    %c5 = arith.constant 5 : index
    %45 = memref.load %arg2[%c5] : memref<98xf32, #tpu.memory_space<smem>>
    %c0_32 = arith.constant 0 : index
    %c0_33 = arith.constant 0 : index
    %c5_34 = arith.constant 5 : index
    %46 = vector.load %arg4[%c0_32, %c0_33, %c5_34] : memref<2x22x22xf32, #tpu.memory_space<vmem>>, vector<1x16x16xf32>
    %47 = vector.shape_cast %46 : vector<1x16x16xf32> to vector<16x16xf32>
    %48 = vector.broadcast %45 : f32 to vector<16x16xf32>
    %49 = arith.mulf %48, %47 : vector<16x16xf32>
    %50 = arith.addf %44, %49 : vector<16x16xf32>
    %c6 = arith.constant 6 : index
    %51 = memref.load %arg2[%c6] : memref<98xf32, #tpu.memory_space<smem>>
    %c0_35 = arith.constant 0 : index
    %c0_36 = arith.constant 0 : index
    %c6_37 = arith.constant 6 : index
    %52 = vector.load %arg4[%c0_35, %c0_36, %c6_37] : memref<2x22x22xf32, #tpu.memory_space<vmem>>, vector<1x16x16xf32>
    %53 = vector.shape_cast %52 : vector<1x16x16xf32> to vector<16x16xf32>
    %54 = vector.broadcast %51 : f32 to vector<16x16xf32>
    %55 = arith.mulf %54, %53 : vector<16x16xf32>
    %56 = arith.addf %50, %55 : vector<16x16xf32>
    %c7 = arith.constant 7 : index
    %57 = memref.load %arg2[%c7] : memref<98xf32, #tpu.memory_space<smem>>
    %c0_38 = arith.constant 0 : index
    %c1_39 = arith.constant 1 : index
    %c0_40 = arith.constant 0 : index
    %58 = vector.load %arg4[%c0_38, %c1_39, %c0_40] : memref<2x22x22xf32, #tpu.memory_space<vmem>>, vector<1x16x16xf32>
    %59 = vector.shape_cast %58 : vector<1x16x16xf32> to vector<16x16xf32>
    %60 = vector.broadcast %57 : f32 to vector<16x16xf32>
    %61 = arith.mulf %60, %59 : vector<16x16xf32>
    %62 = arith.addf %56, %61 : vector<16x16xf32>
    %c8 = arith.constant 8 : index
    %63 = memref.load %arg2[%c8] : memref<98xf32, #tpu.memory_space<smem>>
    %c0_41 = arith.constant 0 : index
    %c1_42 = arith.constant 1 : index
    %c1_43 = arith.constant 1 : index
    %64 = vector.load %arg4[%c0_41, %c1_42, %c1_43] : memref<2x22x22xf32, #tpu.memory_space<vmem>>, vector<1x16x16xf32>
    %65 = vector.shape_cast %64 : vector<1x16x16xf32> to vector<16x16xf32>
    %66 = vector.broadcast %63 : f32 to vector<16x16xf32>
    %67 = arith.mulf %66, %65 : vector<16x16xf32>
    %68 = arith.addf %62, %67 : vector<16x16xf32>
    %c9 = arith.constant 9 : index
    %69 = memref.load %arg2[%c9] : memref<98xf32, #tpu.memory_space<smem>>
    %c0_44 = arith.constant 0 : index
    %c1_45 = arith.constant 1 : index
    %c2_46 = arith.constant 2 : index
    %70 = vector.load %arg4[%c0_44, %c1_45, %c2_46] : memref<2x22x22xf32, #tpu.memory_space<vmem>>, vector<1x16x16xf32>
    %71 = vector.shape_cast %70 : vector<1x16x16xf32> to vector<16x16xf32>
    %72 = vector.broadcast %69 : f32 to vector<16x16xf32>
    %73 = arith.mulf %72, %71 : vector<16x16xf32>
    %74 = arith.addf %68, %73 : vector<16x16xf32>
    %c10 = arith.constant 10 : index
    %75 = memref.load %arg2[%c10] : memref<98xf32, #tpu.memory_space<smem>>
    %c0_47 = arith.constant 0 : index
    %c1_48 = arith.constant 1 : index
    %c3_49 = arith.constant 3 : index
    %76 = vector.load %arg4[%c0_47, %c1_48, %c3_49] : memref<2x22x22xf32, #tpu.memory_space<vmem>>, vector<1x16x16xf32>
    %77 = vector.shape_cast %76 : vector<1x16x16xf32> to vector<16x16xf32>
    %78 = vector.broadcast %75 : f32 to vector<16x16xf32>
    %79 = arith.mulf %78, %77 : vector<16x16xf32>
    %80 = arith.addf %74, %79 : vector<16x16xf32>
    %c11 = arith.constant 11 : index
    %81 = memref.load %arg2[%c11] : memref<98xf32, #tpu.memory_space<smem>>
    %c0_50 = arith.constant 0 : index
    %c1_51 = arith.constant 1 : index
    %c4_52 = arith.constant 4 : index
    %82 = vector.load %arg4[%c0_50, %c1_51, %c4_52] : memref<2x22x22xf32, #tpu.memory_space<vmem>>, vector<1x16x16xf32>
    %83 = vector.shape_cast %82 : vector<1x16x16xf32> to vector<16x16xf32>
    %84 = vector.broadcast %81 : f32 to vector<16x16xf32>
    %85 = arith.mulf %84, %83 : vector<16x16xf32>
    %86 = arith.addf %80, %85 : vector<16x16xf32>
    %c12 = arith.constant 12 : index
    %87 = memref.load %arg2[%c12] : memref<98xf32, #tpu.memory_space<smem>>
    %c0_53 = arith.constant 0 : index
    %c1_54 = arith.constant 1 : index
    %c5_55 = arith.constant 5 : index
    %88 = vector.load %arg4[%c0_53, %c1_54, %c5_55] : memref<2x22x22xf32, #tpu.memory_space<vmem>>, vector<1x16x16xf32>
    %89 = vector.shape_cast %88 : vector<1x16x16xf32> to vector<16x16xf32>
    %90 = vector.broadcast %87 : f32 to vector<16x16xf32>
    %91 = arith.mulf %90, %89 : vector<16x16xf32>
    %92 = arith.addf %86, %91 : vector<16x16xf32>
    %c13 = arith.constant 13 : index
    %93 = memref.load %arg2[%c13] : memref<98xf32, #tpu.memory_space<smem>>
    %c0_56 = arith.constant 0 : index
    %c1_57 = arith.constant 1 : index
    %c6_58 = arith.constant 6 : index
    %94 = vector.load %arg4[%c0_56, %c1_57, %c6_58] : memref<2x22x22xf32, #tpu.memory_space<vmem>>, vector<1x16x16xf32>
    %95 = vector.shape_cast %94 : vector<1x16x16xf32> to vector<16x16xf32>
    %96 = vector.broadcast %93 : f32 to vector<16x16xf32>
    %97 = arith.mulf %96, %95 : vector<16x16xf32>
    %98 = arith.addf %92, %97 : vector<16x16xf32>
    %c14 = arith.constant 14 : index
    %99 = memref.load %arg2[%c14] : memref<98xf32, #tpu.memory_space<smem>>
    %c0_59 = arith.constant 0 : index
    %c2_60 = arith.constant 2 : index
    %c0_61 = arith.constant 0 : index
    %100 = vector.load %arg4[%c0_59, %c2_60, %c0_61] : memref<2x22x22xf32, #tpu.memory_space<vmem>>, vector<1x16x16xf32>
    %101 = vector.shape_cast %100 : vector<1x16x16xf32> to vector<16x16xf32>
    %102 = vector.broadcast %99 : f32 to vector<16x16xf32>
    %103 = arith.mulf %102, %101 : vector<16x16xf32>
    %104 = arith.addf %98, %103 : vector<16x16xf32>
    %c15 = arith.constant 15 : index
    %105 = memref.load %arg2[%c15] : memref<98xf32, #tpu.memory_space<smem>>
    %c0_62 = arith.constant 0 : index
    %c2_63 = arith.constant 2 : index
    %c1_64 = arith.constant 1 : index
    %106 = vector.load %arg4[%c0_62, %c2_63, %c1_64] : memref<2x22x22xf32, #tpu.memory_space<vmem>>, vector<1x16x16xf32>
    %107 = vector.shape_cast %106 : vector<1x16x16xf32> to vector<16x16xf32>
    %108 = vector.broadcast %105 : f32 to vector<16x16xf32>
    %109 = arith.mulf %108, %107 : vector<16x16xf32>
    %110 = arith.addf %104, %109 : vector<16x16xf32>
    %c16 = arith.constant 16 : index
    %111 = memref.load %arg2[%c16] : memref<98xf32, #tpu.memory_space<smem>>
    %c0_65 = arith.constant 0 : index
    %c2_66 = arith.constant 2 : index
    %c2_67 = arith.constant 2 : index
    %112 = vector.load %arg4[%c0_65, %c2_66, %c2_67] : memref<2x22x22xf32, #tpu.memory_space<vmem>>, vector<1x16x16xf32>
    %113 = vector.shape_cast %112 : vector<1x16x16xf32> to vector<16x16xf32>
    %114 = vector.broadcast %111 : f32 to vector<16x16xf32>
    %115 = arith.mulf %114, %113 : vector<16x16xf32>
    %116 = arith.addf %110, %115 : vector<16x16xf32>
    %c17 = arith.constant 17 : index
    %117 = memref.load %arg2[%c17] : memref<98xf32, #tpu.memory_space<smem>>
    %c0_68 = arith.constant 0 : index
    %c2_69 = arith.constant 2 : index
    %c3_70 = arith.constant 3 : index
    %118 = vector.load %arg4[%c0_68, %c2_69, %c3_70] : memref<2x22x22xf32, #tpu.memory_space<vmem>>, vector<1x16x16xf32>
    %119 = vector.shape_cast %118 : vector<1x16x16xf32> to vector<16x16xf32>
    %120 = vector.broadcast %117 : f32 to vector<16x16xf32>
    %121 = arith.mulf %120, %119 : vector<16x16xf32>
    %122 = arith.addf %116, %121 : vector<16x16xf32>
    %c18 = arith.constant 18 : index
    %123 = memref.load %arg2[%c18] : memref<98xf32, #tpu.memory_space<smem>>
    %c0_71 = arith.constant 0 : index
    %c2_72 = arith.constant 2 : index
    %c4_73 = arith.constant 4 : index
    %124 = vector.load %arg4[%c0_71, %c2_72, %c4_73] : memref<2x22x22xf32, #tpu.memory_space<vmem>>, vector<1x16x16xf32>
    %125 = vector.shape_cast %124 : vector<1x16x16xf32> to vector<16x16xf32>
    %126 = vector.broadcast %123 : f32 to vector<16x16xf32>
    %127 = arith.mulf %126, %125 : vector<16x16xf32>
    %128 = arith.addf %122, %127 : vector<16x16xf32>
    %c19 = arith.constant 19 : index
    %129 = memref.load %arg2[%c19] : memref<98xf32, #tpu.memory_space<smem>>
    %c0_74 = arith.constant 0 : index
    %c2_75 = arith.constant 2 : index
    %c5_76 = arith.constant 5 : index
    %130 = vector.load %arg4[%c0_74, %c2_75, %c5_76] : memref<2x22x22xf32, #tpu.memory_space<vmem>>, vector<1x16x16xf32>
    %131 = vector.shape_cast %130 : vector<1x16x16xf32> to vector<16x16xf32>
    %132 = vector.broadcast %129 : f32 to vector<16x16xf32>
    %133 = arith.mulf %132, %131 : vector<16x16xf32>
    %134 = arith.addf %128, %133 : vector<16x16xf32>
    %c20 = arith.constant 20 : index
    %135 = memref.load %arg2[%c20] : memref<98xf32, #tpu.memory_space<smem>>
    %c0_77 = arith.constant 0 : index
    %c2_78 = arith.constant 2 : index
    %c6_79 = arith.constant 6 : index
    %136 = vector.load %arg4[%c0_77, %c2_78, %c6_79] : memref<2x22x22xf32, #tpu.memory_space<vmem>>, vector<1x16x16xf32>
    %137 = vector.shape_cast %136 : vector<1x16x16xf32> to vector<16x16xf32>
    %138 = vector.broadcast %135 : f32 to vector<16x16xf32>
    %139 = arith.mulf %138, %137 : vector<16x16xf32>
    %140 = arith.addf %134, %139 : vector<16x16xf32>
    %c21 = arith.constant 21 : index
    %141 = memref.load %arg2[%c21] : memref<98xf32, #tpu.memory_space<smem>>
    %c0_80 = arith.constant 0 : index
    %c3_81 = arith.constant 3 : index
    %c0_82 = arith.constant 0 : index
    %142 = vector.load %arg4[%c0_80, %c3_81, %c0_82] : memref<2x22x22xf32, #tpu.memory_space<vmem>>, vector<1x16x16xf32>
    %143 = vector.shape_cast %142 : vector<1x16x16xf32> to vector<16x16xf32>
    %144 = vector.broadcast %141 : f32 to vector<16x16xf32>
    %145 = arith.mulf %144, %143 : vector<16x16xf32>
    %146 = arith.addf %140, %145 : vector<16x16xf32>
    %c22 = arith.constant 22 : index
    %147 = memref.load %arg2[%c22] : memref<98xf32, #tpu.memory_space<smem>>
    %c0_83 = arith.constant 0 : index
    %c3_84 = arith.constant 3 : index
    %c1_85 = arith.constant 1 : index
    %148 = vector.load %arg4[%c0_83, %c3_84, %c1_85] : memref<2x22x22xf32, #tpu.memory_space<vmem>>, vector<1x16x16xf32>
    %149 = vector.shape_cast %148 : vector<1x16x16xf32> to vector<16x16xf32>
    %150 = vector.broadcast %147 : f32 to vector<16x16xf32>
    %151 = arith.mulf %150, %149 : vector<16x16xf32>
    %152 = arith.addf %146, %151 : vector<16x16xf32>
    %c23 = arith.constant 23 : index
    %153 = memref.load %arg2[%c23] : memref<98xf32, #tpu.memory_space<smem>>
    %c0_86 = arith.constant 0 : index
    %c3_87 = arith.constant 3 : index
    %c2_88 = arith.constant 2 : index
    %154 = vector.load %arg4[%c0_86, %c3_87, %c2_88] : memref<2x22x22xf32, #tpu.memory_space<vmem>>, vector<1x16x16xf32>
    %155 = vector.shape_cast %154 : vector<1x16x16xf32> to vector<16x16xf32>
    %156 = vector.broadcast %153 : f32 to vector<16x16xf32>
    %157 = arith.mulf %156, %155 : vector<16x16xf32>
    %158 = arith.addf %152, %157 : vector<16x16xf32>
    %c24 = arith.constant 24 : index
    %159 = memref.load %arg2[%c24] : memref<98xf32, #tpu.memory_space<smem>>
    %c0_89 = arith.constant 0 : index
    %c3_90 = arith.constant 3 : index
    %c3_91 = arith.constant 3 : index
    %160 = vector.load %arg4[%c0_89, %c3_90, %c3_91] : memref<2x22x22xf32, #tpu.memory_space<vmem>>, vector<1x16x16xf32>
    %161 = vector.shape_cast %160 : vector<1x16x16xf32> to vector<16x16xf32>
    %162 = vector.broadcast %159 : f32 to vector<16x16xf32>
    %163 = arith.mulf %162, %161 : vector<16x16xf32>
    %164 = arith.addf %158, %163 : vector<16x16xf32>
    %c25 = arith.constant 25 : index
    %165 = memref.load %arg2[%c25] : memref<98xf32, #tpu.memory_space<smem>>
    %c0_92 = arith.constant 0 : index
    %c3_93 = arith.constant 3 : index
    %c4_94 = arith.constant 4 : index
    %166 = vector.load %arg4[%c0_92, %c3_93, %c4_94] : memref<2x22x22xf32, #tpu.memory_space<vmem>>, vector<1x16x16xf32>
    %167 = vector.shape_cast %166 : vector<1x16x16xf32> to vector<16x16xf32>
    %168 = vector.broadcast %165 : f32 to vector<16x16xf32>
    %169 = arith.mulf %168, %167 : vector<16x16xf32>
    %170 = arith.addf %164, %169 : vector<16x16xf32>
    %c26 = arith.constant 26 : index
    %171 = memref.load %arg2[%c26] : memref<98xf32, #tpu.memory_space<smem>>
    %c0_95 = arith.constant 0 : index
    %c3_96 = arith.constant 3 : index
    %c5_97 = arith.constant 5 : index
    %172 = vector.load %arg4[%c0_95, %c3_96, %c5_97] : memref<2x22x22xf32, #tpu.memory_space<vmem>>, vector<1x16x16xf32>
    %173 = vector.shape_cast %172 : vector<1x16x16xf32> to vector<16x16xf32>
    %174 = vector.broadcast %171 : f32 to vector<16x16xf32>
    %175 = arith.mulf %174, %173 : vector<16x16xf32>
    %176 = arith.addf %170, %175 : vector<16x16xf32>
    %c27 = arith.constant 27 : index
    %177 = memref.load %arg2[%c27] : memref<98xf32, #tpu.memory_space<smem>>
    %c0_98 = arith.constant 0 : index
    %c3_99 = arith.constant 3 : index
    %c6_100 = arith.constant 6 : index
    %178 = vector.load %arg4[%c0_98, %c3_99, %c6_100] : memref<2x22x22xf32, #tpu.memory_space<vmem>>, vector<1x16x16xf32>
    %179 = vector.shape_cast %178 : vector<1x16x16xf32> to vector<16x16xf32>
    %180 = vector.broadcast %177 : f32 to vector<16x16xf32>
    %181 = arith.mulf %180, %179 : vector<16x16xf32>
    %182 = arith.addf %176, %181 : vector<16x16xf32>
    %c28 = arith.constant 28 : index
    %183 = memref.load %arg2[%c28] : memref<98xf32, #tpu.memory_space<smem>>
    %c0_101 = arith.constant 0 : index
    %c4_102 = arith.constant 4 : index
    %c0_103 = arith.constant 0 : index
    %184 = vector.load %arg4[%c0_101, %c4_102, %c0_103] : memref<2x22x22xf32, #tpu.memory_space<vmem>>, vector<1x16x16xf32>
    %185 = vector.shape_cast %184 : vector<1x16x16xf32> to vector<16x16xf32>
    %186 = vector.broadcast %183 : f32 to vector<16x16xf32>
    %187 = arith.mulf %186, %185 : vector<16x16xf32>
    %188 = arith.addf %182, %187 : vector<16x16xf32>
    %c29 = arith.constant 29 : index
    %189 = memref.load %arg2[%c29] : memref<98xf32, #tpu.memory_space<smem>>
    %c0_104 = arith.constant 0 : index
    %c4_105 = arith.constant 4 : index
    %c1_106 = arith.constant 1 : index
    %190 = vector.load %arg4[%c0_104, %c4_105, %c1_106] : memref<2x22x22xf32, #tpu.memory_space<vmem>>, vector<1x16x16xf32>
    %191 = vector.shape_cast %190 : vector<1x16x16xf32> to vector<16x16xf32>
    %192 = vector.broadcast %189 : f32 to vector<16x16xf32>
    %193 = arith.mulf %192, %191 : vector<16x16xf32>
    %194 = arith.addf %188, %193 : vector<16x16xf32>
    %c30 = arith.constant 30 : index
    %195 = memref.load %arg2[%c30] : memref<98xf32, #tpu.memory_space<smem>>
    %c0_107 = arith.constant 0 : index
    %c4_108 = arith.constant 4 : index
    %c2_109 = arith.constant 2 : index
    %196 = vector.load %arg4[%c0_107, %c4_108, %c2_109] : memref<2x22x22xf32, #tpu.memory_space<vmem>>, vector<1x16x16xf32>
    %197 = vector.shape_cast %196 : vector<1x16x16xf32> to vector<16x16xf32>
    %198 = vector.broadcast %195 : f32 to vector<16x16xf32>
    %199 = arith.mulf %198, %197 : vector<16x16xf32>
    %200 = arith.addf %194, %199 : vector<16x16xf32>
    %c31 = arith.constant 31 : index
    %201 = memref.load %arg2[%c31] : memref<98xf32, #tpu.memory_space<smem>>
    %c0_110 = arith.constant 0 : index
    %c4_111 = arith.constant 4 : index
    %c3_112 = arith.constant 3 : index
    %202 = vector.load %arg4[%c0_110, %c4_111, %c3_112] : memref<2x22x22xf32, #tpu.memory_space<vmem>>, vector<1x16x16xf32>
    %203 = vector.shape_cast %202 : vector<1x16x16xf32> to vector<16x16xf32>
    %204 = vector.broadcast %201 : f32 to vector<16x16xf32>
    %205 = arith.mulf %204, %203 : vector<16x16xf32>
    %206 = arith.addf %200, %205 : vector<16x16xf32>
    %c32 = arith.constant 32 : index
    %207 = memref.load %arg2[%c32] : memref<98xf32, #tpu.memory_space<smem>>
    %c0_113 = arith.constant 0 : index
    %c4_114 = arith.constant 4 : index
    %c4_115 = arith.constant 4 : index
    %208 = vector.load %arg4[%c0_113, %c4_114, %c4_115] : memref<2x22x22xf32, #tpu.memory_space<vmem>>, vector<1x16x16xf32>
    %209 = vector.shape_cast %208 : vector<1x16x16xf32> to vector<16x16xf32>
    %210 = vector.broadcast %207 : f32 to vector<16x16xf32>
    %211 = arith.mulf %210, %209 : vector<16x16xf32>
    %212 = arith.addf %206, %211 : vector<16x16xf32>
    %c33 = arith.constant 33 : index
    %213 = memref.load %arg2[%c33] : memref<98xf32, #tpu.memory_space<smem>>
    %c0_116 = arith.constant 0 : index
    %c4_117 = arith.constant 4 : index
    %c5_118 = arith.constant 5 : index
    %214 = vector.load %arg4[%c0_116, %c4_117, %c5_118] : memref<2x22x22xf32, #tpu.memory_space<vmem>>, vector<1x16x16xf32>
    %215 = vector.shape_cast %214 : vector<1x16x16xf32> to vector<16x16xf32>
    %216 = vector.broadcast %213 : f32 to vector<16x16xf32>
    %217 = arith.mulf %216, %215 : vector<16x16xf32>
    %218 = arith.addf %212, %217 : vector<16x16xf32>
    %c34 = arith.constant 34 : index
    %219 = memref.load %arg2[%c34] : memref<98xf32, #tpu.memory_space<smem>>
    %c0_119 = arith.constant 0 : index
    %c4_120 = arith.constant 4 : index
    %c6_121 = arith.constant 6 : index
    %220 = vector.load %arg4[%c0_119, %c4_120, %c6_121] : memref<2x22x22xf32, #tpu.memory_space<vmem>>, vector<1x16x16xf32>
    %221 = vector.shape_cast %220 : vector<1x16x16xf32> to vector<16x16xf32>
    %222 = vector.broadcast %219 : f32 to vector<16x16xf32>
    %223 = arith.mulf %222, %221 : vector<16x16xf32>
    %224 = arith.addf %218, %223 : vector<16x16xf32>
    %c35 = arith.constant 35 : index
    %225 = memref.load %arg2[%c35] : memref<98xf32, #tpu.memory_space<smem>>
    %c0_122 = arith.constant 0 : index
    %c5_123 = arith.constant 5 : index
    %c0_124 = arith.constant 0 : index
    %226 = vector.load %arg4[%c0_122, %c5_123, %c0_124] : memref<2x22x22xf32, #tpu.memory_space<vmem>>, vector<1x16x16xf32>
    %227 = vector.shape_cast %226 : vector<1x16x16xf32> to vector<16x16xf32>
    %228 = vector.broadcast %225 : f32 to vector<16x16xf32>
    %229 = arith.mulf %228, %227 : vector<16x16xf32>
    %230 = arith.addf %224, %229 : vector<16x16xf32>
    %c36 = arith.constant 36 : index
    %231 = memref.load %arg2[%c36] : memref<98xf32, #tpu.memory_space<smem>>
    %c0_125 = arith.constant 0 : index
    %c5_126 = arith.constant 5 : index
    %c1_127 = arith.constant 1 : index
    %232 = vector.load %arg4[%c0_125, %c5_126, %c1_127] : memref<2x22x22xf32, #tpu.memory_space<vmem>>, vector<1x16x16xf32>
    %233 = vector.shape_cast %232 : vector<1x16x16xf32> to vector<16x16xf32>
    %234 = vector.broadcast %231 : f32 to vector<16x16xf32>
    %235 = arith.mulf %234, %233 : vector<16x16xf32>
    %236 = arith.addf %230, %235 : vector<16x16xf32>
    %c37 = arith.constant 37 : index
    %237 = memref.load %arg2[%c37] : memref<98xf32, #tpu.memory_space<smem>>
    %c0_128 = arith.constant 0 : index
    %c5_129 = arith.constant 5 : index
    %c2_130 = arith.constant 2 : index
    %238 = vector.load %arg4[%c0_128, %c5_129, %c2_130] : memref<2x22x22xf32, #tpu.memory_space<vmem>>, vector<1x16x16xf32>
    %239 = vector.shape_cast %238 : vector<1x16x16xf32> to vector<16x16xf32>
    %240 = vector.broadcast %237 : f32 to vector<16x16xf32>
    %241 = arith.mulf %240, %239 : vector<16x16xf32>
    %242 = arith.addf %236, %241 : vector<16x16xf32>
    %c38 = arith.constant 38 : index
    %243 = memref.load %arg2[%c38] : memref<98xf32, #tpu.memory_space<smem>>
    %c0_131 = arith.constant 0 : index
    %c5_132 = arith.constant 5 : index
    %c3_133 = arith.constant 3 : index
    %244 = vector.load %arg4[%c0_131, %c5_132, %c3_133] : memref<2x22x22xf32, #tpu.memory_space<vmem>>, vector<1x16x16xf32>
    %245 = vector.shape_cast %244 : vector<1x16x16xf32> to vector<16x16xf32>
    %246 = vector.broadcast %243 : f32 to vector<16x16xf32>
    %247 = arith.mulf %246, %245 : vector<16x16xf32>
    %248 = arith.addf %242, %247 : vector<16x16xf32>
    %c39 = arith.constant 39 : index
    %249 = memref.load %arg2[%c39] : memref<98xf32, #tpu.memory_space<smem>>
    %c0_134 = arith.constant 0 : index
    %c5_135 = arith.constant 5 : index
    %c4_136 = arith.constant 4 : index
    %250 = vector.load %arg4[%c0_134, %c5_135, %c4_136] : memref<2x22x22xf32, #tpu.memory_space<vmem>>, vector<1x16x16xf32>
    %251 = vector.shape_cast %250 : vector<1x16x16xf32> to vector<16x16xf32>
    %252 = vector.broadcast %249 : f32 to vector<16x16xf32>
    %253 = arith.mulf %252, %251 : vector<16x16xf32>
    %254 = arith.addf %248, %253 : vector<16x16xf32>
    %c40 = arith.constant 40 : index
    %255 = memref.load %arg2[%c40] : memref<98xf32, #tpu.memory_space<smem>>
    %c0_137 = arith.constant 0 : index
    %c5_138 = arith.constant 5 : index
    %c5_139 = arith.constant 5 : index
    %256 = vector.load %arg4[%c0_137, %c5_138, %c5_139] : memref<2x22x22xf32, #tpu.memory_space<vmem>>, vector<1x16x16xf32>
    %257 = vector.shape_cast %256 : vector<1x16x16xf32> to vector<16x16xf32>
    %258 = vector.broadcast %255 : f32 to vector<16x16xf32>
    %259 = arith.mulf %258, %257 : vector<16x16xf32>
    %260 = arith.addf %254, %259 : vector<16x16xf32>
    %c41 = arith.constant 41 : index
    %261 = memref.load %arg2[%c41] : memref<98xf32, #tpu.memory_space<smem>>
    %c0_140 = arith.constant 0 : index
    %c5_141 = arith.constant 5 : index
    %c6_142 = arith.constant 6 : index
    %262 = vector.load %arg4[%c0_140, %c5_141, %c6_142] : memref<2x22x22xf32, #tpu.memory_space<vmem>>, vector<1x16x16xf32>
    %263 = vector.shape_cast %262 : vector<1x16x16xf32> to vector<16x16xf32>
    %264 = vector.broadcast %261 : f32 to vector<16x16xf32>
    %265 = arith.mulf %264, %263 : vector<16x16xf32>
    %266 = arith.addf %260, %265 : vector<16x16xf32>
    %c42 = arith.constant 42 : index
    %267 = memref.load %arg2[%c42] : memref<98xf32, #tpu.memory_space<smem>>
    %c0_143 = arith.constant 0 : index
    %c6_144 = arith.constant 6 : index
    %c0_145 = arith.constant 0 : index
    %268 = vector.load %arg4[%c0_143, %c6_144, %c0_145] : memref<2x22x22xf32, #tpu.memory_space<vmem>>, vector<1x16x16xf32>
    %269 = vector.shape_cast %268 : vector<1x16x16xf32> to vector<16x16xf32>
    %270 = vector.broadcast %267 : f32 to vector<16x16xf32>
    %271 = arith.mulf %270, %269 : vector<16x16xf32>
    %272 = arith.addf %266, %271 : vector<16x16xf32>
    %c43 = arith.constant 43 : index
    %273 = memref.load %arg2[%c43] : memref<98xf32, #tpu.memory_space<smem>>
    %c0_146 = arith.constant 0 : index
    %c6_147 = arith.constant 6 : index
    %c1_148 = arith.constant 1 : index
    %274 = vector.load %arg4[%c0_146, %c6_147, %c1_148] : memref<2x22x22xf32, #tpu.memory_space<vmem>>, vector<1x16x16xf32>
    %275 = vector.shape_cast %274 : vector<1x16x16xf32> to vector<16x16xf32>
    %276 = vector.broadcast %273 : f32 to vector<16x16xf32>
    %277 = arith.mulf %276, %275 : vector<16x16xf32>
    %278 = arith.addf %272, %277 : vector<16x16xf32>
    %c44 = arith.constant 44 : index
    %279 = memref.load %arg2[%c44] : memref<98xf32, #tpu.memory_space<smem>>
    %c0_149 = arith.constant 0 : index
    %c6_150 = arith.constant 6 : index
    %c2_151 = arith.constant 2 : index
    %280 = vector.load %arg4[%c0_149, %c6_150, %c2_151] : memref<2x22x22xf32, #tpu.memory_space<vmem>>, vector<1x16x16xf32>
    %281 = vector.shape_cast %280 : vector<1x16x16xf32> to vector<16x16xf32>
    %282 = vector.broadcast %279 : f32 to vector<16x16xf32>
    %283 = arith.mulf %282, %281 : vector<16x16xf32>
    %284 = arith.addf %278, %283 : vector<16x16xf32>
    %c45 = arith.constant 45 : index
    %285 = memref.load %arg2[%c45] : memref<98xf32, #tpu.memory_space<smem>>
    %c0_152 = arith.constant 0 : index
    %c6_153 = arith.constant 6 : index
    %c3_154 = arith.constant 3 : index
    %286 = vector.load %arg4[%c0_152, %c6_153, %c3_154] : memref<2x22x22xf32, #tpu.memory_space<vmem>>, vector<1x16x16xf32>
    %287 = vector.shape_cast %286 : vector<1x16x16xf32> to vector<16x16xf32>
    %288 = vector.broadcast %285 : f32 to vector<16x16xf32>
    %289 = arith.mulf %288, %287 : vector<16x16xf32>
    %290 = arith.addf %284, %289 : vector<16x16xf32>
    %c46 = arith.constant 46 : index
    %291 = memref.load %arg2[%c46] : memref<98xf32, #tpu.memory_space<smem>>
    %c0_155 = arith.constant 0 : index
    %c6_156 = arith.constant 6 : index
    %c4_157 = arith.constant 4 : index
    %292 = vector.load %arg4[%c0_155, %c6_156, %c4_157] : memref<2x22x22xf32, #tpu.memory_space<vmem>>, vector<1x16x16xf32>
    %293 = vector.shape_cast %292 : vector<1x16x16xf32> to vector<16x16xf32>
    %294 = vector.broadcast %291 : f32 to vector<16x16xf32>
    %295 = arith.mulf %294, %293 : vector<16x16xf32>
    %296 = arith.addf %290, %295 : vector<16x16xf32>
    %c47 = arith.constant 47 : index
    %297 = memref.load %arg2[%c47] : memref<98xf32, #tpu.memory_space<smem>>
    %c0_158 = arith.constant 0 : index
    %c6_159 = arith.constant 6 : index
    %c5_160 = arith.constant 5 : index
    %298 = vector.load %arg4[%c0_158, %c6_159, %c5_160] : memref<2x22x22xf32, #tpu.memory_space<vmem>>, vector<1x16x16xf32>
    %299 = vector.shape_cast %298 : vector<1x16x16xf32> to vector<16x16xf32>
    %300 = vector.broadcast %297 : f32 to vector<16x16xf32>
    %301 = arith.mulf %300, %299 : vector<16x16xf32>
    %302 = arith.addf %296, %301 : vector<16x16xf32>
    %c48 = arith.constant 48 : index
    %303 = memref.load %arg2[%c48] : memref<98xf32, #tpu.memory_space<smem>>
    %c0_161 = arith.constant 0 : index
    %c6_162 = arith.constant 6 : index
    %c6_163 = arith.constant 6 : index
    %304 = vector.load %arg4[%c0_161, %c6_162, %c6_163] : memref<2x22x22xf32, #tpu.memory_space<vmem>>, vector<1x16x16xf32>
    %305 = vector.shape_cast %304 : vector<1x16x16xf32> to vector<16x16xf32>
    %306 = vector.broadcast %303 : f32 to vector<16x16xf32>
    %307 = arith.mulf %306, %305 : vector<16x16xf32>
    %308 = arith.addf %302, %307 : vector<16x16xf32>
    %c49 = arith.constant 49 : index
    %309 = memref.load %arg2[%c49] : memref<98xf32, #tpu.memory_space<smem>>
    %c1_164 = arith.constant 1 : index
    %c0_165 = arith.constant 0 : index
    %c0_166 = arith.constant 0 : index
    %310 = vector.load %arg4[%c1_164, %c0_165, %c0_166] : memref<2x22x22xf32, #tpu.memory_space<vmem>>, vector<1x16x16xf32>
    %311 = vector.shape_cast %310 : vector<1x16x16xf32> to vector<16x16xf32>
    %312 = vector.broadcast %309 : f32 to vector<16x16xf32>
    %313 = arith.mulf %312, %311 : vector<16x16xf32>
    %314 = arith.addf %308, %313 : vector<16x16xf32>
    %c50 = arith.constant 50 : index
    %315 = memref.load %arg2[%c50] : memref<98xf32, #tpu.memory_space<smem>>
    %c1_167 = arith.constant 1 : index
    %c0_168 = arith.constant 0 : index
    %c1_169 = arith.constant 1 : index
    %316 = vector.load %arg4[%c1_167, %c0_168, %c1_169] : memref<2x22x22xf32, #tpu.memory_space<vmem>>, vector<1x16x16xf32>
    %317 = vector.shape_cast %316 : vector<1x16x16xf32> to vector<16x16xf32>
    %318 = vector.broadcast %315 : f32 to vector<16x16xf32>
    %319 = arith.mulf %318, %317 : vector<16x16xf32>
    %320 = arith.addf %314, %319 : vector<16x16xf32>
    %c51 = arith.constant 51 : index
    %321 = memref.load %arg2[%c51] : memref<98xf32, #tpu.memory_space<smem>>
    %c1_170 = arith.constant 1 : index
    %c0_171 = arith.constant 0 : index
    %c2_172 = arith.constant 2 : index
    %322 = vector.load %arg4[%c1_170, %c0_171, %c2_172] : memref<2x22x22xf32, #tpu.memory_space<vmem>>, vector<1x16x16xf32>
    %323 = vector.shape_cast %322 : vector<1x16x16xf32> to vector<16x16xf32>
    %324 = vector.broadcast %321 : f32 to vector<16x16xf32>
    %325 = arith.mulf %324, %323 : vector<16x16xf32>
    %326 = arith.addf %320, %325 : vector<16x16xf32>
    %c52 = arith.constant 52 : index
    %327 = memref.load %arg2[%c52] : memref<98xf32, #tpu.memory_space<smem>>
    %c1_173 = arith.constant 1 : index
    %c0_174 = arith.constant 0 : index
    %c3_175 = arith.constant 3 : index
    %328 = vector.load %arg4[%c1_173, %c0_174, %c3_175] : memref<2x22x22xf32, #tpu.memory_space<vmem>>, vector<1x16x16xf32>
    %329 = vector.shape_cast %328 : vector<1x16x16xf32> to vector<16x16xf32>
    %330 = vector.broadcast %327 : f32 to vector<16x16xf32>
    %331 = arith.mulf %330, %329 : vector<16x16xf32>
    %332 = arith.addf %326, %331 : vector<16x16xf32>
    %c53 = arith.constant 53 : index
    %333 = memref.load %arg2[%c53] : memref<98xf32, #tpu.memory_space<smem>>
    %c1_176 = arith.constant 1 : index
    %c0_177 = arith.constant 0 : index
    %c4_178 = arith.constant 4 : index
    %334 = vector.load %arg4[%c1_176, %c0_177, %c4_178] : memref<2x22x22xf32, #tpu.memory_space<vmem>>, vector<1x16x16xf32>
    %335 = vector.shape_cast %334 : vector<1x16x16xf32> to vector<16x16xf32>
    %336 = vector.broadcast %333 : f32 to vector<16x16xf32>
    %337 = arith.mulf %336, %335 : vector<16x16xf32>
    %338 = arith.addf %332, %337 : vector<16x16xf32>
    %c54 = arith.constant 54 : index
    %339 = memref.load %arg2[%c54] : memref<98xf32, #tpu.memory_space<smem>>
    %c1_179 = arith.constant 1 : index
    %c0_180 = arith.constant 0 : index
    %c5_181 = arith.constant 5 : index
    %340 = vector.load %arg4[%c1_179, %c0_180, %c5_181] : memref<2x22x22xf32, #tpu.memory_space<vmem>>, vector<1x16x16xf32>
    %341 = vector.shape_cast %340 : vector<1x16x16xf32> to vector<16x16xf32>
    %342 = vector.broadcast %339 : f32 to vector<16x16xf32>
    %343 = arith.mulf %342, %341 : vector<16x16xf32>
    %344 = arith.addf %338, %343 : vector<16x16xf32>
    %c55 = arith.constant 55 : index
    %345 = memref.load %arg2[%c55] : memref<98xf32, #tpu.memory_space<smem>>
    %c1_182 = arith.constant 1 : index
    %c0_183 = arith.constant 0 : index
    %c6_184 = arith.constant 6 : index
    %346 = vector.load %arg4[%c1_182, %c0_183, %c6_184] : memref<2x22x22xf32, #tpu.memory_space<vmem>>, vector<1x16x16xf32>
    %347 = vector.shape_cast %346 : vector<1x16x16xf32> to vector<16x16xf32>
    %348 = vector.broadcast %345 : f32 to vector<16x16xf32>
    %349 = arith.mulf %348, %347 : vector<16x16xf32>
    %350 = arith.addf %344, %349 : vector<16x16xf32>
    %c56 = arith.constant 56 : index
    %351 = memref.load %arg2[%c56] : memref<98xf32, #tpu.memory_space<smem>>
    %c1_185 = arith.constant 1 : index
    %c1_186 = arith.constant 1 : index
    %c0_187 = arith.constant 0 : index
    %352 = vector.load %arg4[%c1_185, %c1_186, %c0_187] : memref<2x22x22xf32, #tpu.memory_space<vmem>>, vector<1x16x16xf32>
    %353 = vector.shape_cast %352 : vector<1x16x16xf32> to vector<16x16xf32>
    %354 = vector.broadcast %351 : f32 to vector<16x16xf32>
    %355 = arith.mulf %354, %353 : vector<16x16xf32>
    %356 = arith.addf %350, %355 : vector<16x16xf32>
    %c57 = arith.constant 57 : index
    %357 = memref.load %arg2[%c57] : memref<98xf32, #tpu.memory_space<smem>>
    %c1_188 = arith.constant 1 : index
    %c1_189 = arith.constant 1 : index
    %c1_190 = arith.constant 1 : index
    %358 = vector.load %arg4[%c1_188, %c1_189, %c1_190] : memref<2x22x22xf32, #tpu.memory_space<vmem>>, vector<1x16x16xf32>
    %359 = vector.shape_cast %358 : vector<1x16x16xf32> to vector<16x16xf32>
    %360 = vector.broadcast %357 : f32 to vector<16x16xf32>
    %361 = arith.mulf %360, %359 : vector<16x16xf32>
    %362 = arith.addf %356, %361 : vector<16x16xf32>
    %c58 = arith.constant 58 : index
    %363 = memref.load %arg2[%c58] : memref<98xf32, #tpu.memory_space<smem>>
    %c1_191 = arith.constant 1 : index
    %c1_192 = arith.constant 1 : index
    %c2_193 = arith.constant 2 : index
    %364 = vector.load %arg4[%c1_191, %c1_192, %c2_193] : memref<2x22x22xf32, #tpu.memory_space<vmem>>, vector<1x16x16xf32>
    %365 = vector.shape_cast %364 : vector<1x16x16xf32> to vector<16x16xf32>
    %366 = vector.broadcast %363 : f32 to vector<16x16xf32>
    %367 = arith.mulf %366, %365 : vector<16x16xf32>
    %368 = arith.addf %362, %367 : vector<16x16xf32>
    %c59 = arith.constant 59 : index
    %369 = memref.load %arg2[%c59] : memref<98xf32, #tpu.memory_space<smem>>
    %c1_194 = arith.constant 1 : index
    %c1_195 = arith.constant 1 : index
    %c3_196 = arith.constant 3 : index
    %370 = vector.load %arg4[%c1_194, %c1_195, %c3_196] : memref<2x22x22xf32, #tpu.memory_space<vmem>>, vector<1x16x16xf32>
    %371 = vector.shape_cast %370 : vector<1x16x16xf32> to vector<16x16xf32>
    %372 = vector.broadcast %369 : f32 to vector<16x16xf32>
    %373 = arith.mulf %372, %371 : vector<16x16xf32>
    %374 = arith.addf %368, %373 : vector<16x16xf32>
    %c60 = arith.constant 60 : index
    %375 = memref.load %arg2[%c60] : memref<98xf32, #tpu.memory_space<smem>>
    %c1_197 = arith.constant 1 : index
    %c1_198 = arith.constant 1 : index
    %c4_199 = arith.constant 4 : index
    %376 = vector.load %arg4[%c1_197, %c1_198, %c4_199] : memref<2x22x22xf32, #tpu.memory_space<vmem>>, vector<1x16x16xf32>
    %377 = vector.shape_cast %376 : vector<1x16x16xf32> to vector<16x16xf32>
    %378 = vector.broadcast %375 : f32 to vector<16x16xf32>
    %379 = arith.mulf %378, %377 : vector<16x16xf32>
    %380 = arith.addf %374, %379 : vector<16x16xf32>
    %c61 = arith.constant 61 : index
    %381 = memref.load %arg2[%c61] : memref<98xf32, #tpu.memory_space<smem>>
    %c1_200 = arith.constant 1 : index
    %c1_201 = arith.constant 1 : index
    %c5_202 = arith.constant 5 : index
    %382 = vector.load %arg4[%c1_200, %c1_201, %c5_202] : memref<2x22x22xf32, #tpu.memory_space<vmem>>, vector<1x16x16xf32>
    %383 = vector.shape_cast %382 : vector<1x16x16xf32> to vector<16x16xf32>
    %384 = vector.broadcast %381 : f32 to vector<16x16xf32>
    %385 = arith.mulf %384, %383 : vector<16x16xf32>
    %386 = arith.addf %380, %385 : vector<16x16xf32>
    %c62 = arith.constant 62 : index
    %387 = memref.load %arg2[%c62] : memref<98xf32, #tpu.memory_space<smem>>
    %c1_203 = arith.constant 1 : index
    %c1_204 = arith.constant 1 : index
    %c6_205 = arith.constant 6 : index
    %388 = vector.load %arg4[%c1_203, %c1_204, %c6_205] : memref<2x22x22xf32, #tpu.memory_space<vmem>>, vector<1x16x16xf32>
    %389 = vector.shape_cast %388 : vector<1x16x16xf32> to vector<16x16xf32>
    %390 = vector.broadcast %387 : f32 to vector<16x16xf32>
    %391 = arith.mulf %390, %389 : vector<16x16xf32>
    %392 = arith.addf %386, %391 : vector<16x16xf32>
    %c63 = arith.constant 63 : index
    %393 = memref.load %arg2[%c63] : memref<98xf32, #tpu.memory_space<smem>>
    %c1_206 = arith.constant 1 : index
    %c2_207 = arith.constant 2 : index
    %c0_208 = arith.constant 0 : index
    %394 = vector.load %arg4[%c1_206, %c2_207, %c0_208] : memref<2x22x22xf32, #tpu.memory_space<vmem>>, vector<1x16x16xf32>
    %395 = vector.shape_cast %394 : vector<1x16x16xf32> to vector<16x16xf32>
    %396 = vector.broadcast %393 : f32 to vector<16x16xf32>
    %397 = arith.mulf %396, %395 : vector<16x16xf32>
    %398 = arith.addf %392, %397 : vector<16x16xf32>
    %c64 = arith.constant 64 : index
    %399 = memref.load %arg2[%c64] : memref<98xf32, #tpu.memory_space<smem>>
    %c1_209 = arith.constant 1 : index
    %c2_210 = arith.constant 2 : index
    %c1_211 = arith.constant 1 : index
    %400 = vector.load %arg4[%c1_209, %c2_210, %c1_211] : memref<2x22x22xf32, #tpu.memory_space<vmem>>, vector<1x16x16xf32>
    %401 = vector.shape_cast %400 : vector<1x16x16xf32> to vector<16x16xf32>
    %402 = vector.broadcast %399 : f32 to vector<16x16xf32>
    %403 = arith.mulf %402, %401 : vector<16x16xf32>
    %404 = arith.addf %398, %403 : vector<16x16xf32>
    %c65 = arith.constant 65 : index
    %405 = memref.load %arg2[%c65] : memref<98xf32, #tpu.memory_space<smem>>
    %c1_212 = arith.constant 1 : index
    %c2_213 = arith.constant 2 : index
    %c2_214 = arith.constant 2 : index
    %406 = vector.load %arg4[%c1_212, %c2_213, %c2_214] : memref<2x22x22xf32, #tpu.memory_space<vmem>>, vector<1x16x16xf32>
    %407 = vector.shape_cast %406 : vector<1x16x16xf32> to vector<16x16xf32>
    %408 = vector.broadcast %405 : f32 to vector<16x16xf32>
    %409 = arith.mulf %408, %407 : vector<16x16xf32>
    %410 = arith.addf %404, %409 : vector<16x16xf32>
    %c66 = arith.constant 66 : index
    %411 = memref.load %arg2[%c66] : memref<98xf32, #tpu.memory_space<smem>>
    %c1_215 = arith.constant 1 : index
    %c2_216 = arith.constant 2 : index
    %c3_217 = arith.constant 3 : index
    %412 = vector.load %arg4[%c1_215, %c2_216, %c3_217] : memref<2x22x22xf32, #tpu.memory_space<vmem>>, vector<1x16x16xf32>
    %413 = vector.shape_cast %412 : vector<1x16x16xf32> to vector<16x16xf32>
    %414 = vector.broadcast %411 : f32 to vector<16x16xf32>
    %415 = arith.mulf %414, %413 : vector<16x16xf32>
    %416 = arith.addf %410, %415 : vector<16x16xf32>
    %c67 = arith.constant 67 : index
    %417 = memref.load %arg2[%c67] : memref<98xf32, #tpu.memory_space<smem>>
    %c1_218 = arith.constant 1 : index
    %c2_219 = arith.constant 2 : index
    %c4_220 = arith.constant 4 : index
    %418 = vector.load %arg4[%c1_218, %c2_219, %c4_220] : memref<2x22x22xf32, #tpu.memory_space<vmem>>, vector<1x16x16xf32>
    %419 = vector.shape_cast %418 : vector<1x16x16xf32> to vector<16x16xf32>
    %420 = vector.broadcast %417 : f32 to vector<16x16xf32>
    %421 = arith.mulf %420, %419 : vector<16x16xf32>
    %422 = arith.addf %416, %421 : vector<16x16xf32>
    %c68 = arith.constant 68 : index
    %423 = memref.load %arg2[%c68] : memref<98xf32, #tpu.memory_space<smem>>
    %c1_221 = arith.constant 1 : index
    %c2_222 = arith.constant 2 : index
    %c5_223 = arith.constant 5 : index
    %424 = vector.load %arg4[%c1_221, %c2_222, %c5_223] : memref<2x22x22xf32, #tpu.memory_space<vmem>>, vector<1x16x16xf32>
    %425 = vector.shape_cast %424 : vector<1x16x16xf32> to vector<16x16xf32>
    %426 = vector.broadcast %423 : f32 to vector<16x16xf32>
    %427 = arith.mulf %426, %425 : vector<16x16xf32>
    %428 = arith.addf %422, %427 : vector<16x16xf32>
    %c69 = arith.constant 69 : index
    %429 = memref.load %arg2[%c69] : memref<98xf32, #tpu.memory_space<smem>>
    %c1_224 = arith.constant 1 : index
    %c2_225 = arith.constant 2 : index
    %c6_226 = arith.constant 6 : index
    %430 = vector.load %arg4[%c1_224, %c2_225, %c6_226] : memref<2x22x22xf32, #tpu.memory_space<vmem>>, vector<1x16x16xf32>
    %431 = vector.shape_cast %430 : vector<1x16x16xf32> to vector<16x16xf32>
    %432 = vector.broadcast %429 : f32 to vector<16x16xf32>
    %433 = arith.mulf %432, %431 : vector<16x16xf32>
    %434 = arith.addf %428, %433 : vector<16x16xf32>
    %c70 = arith.constant 70 : index
    %435 = memref.load %arg2[%c70] : memref<98xf32, #tpu.memory_space<smem>>
    %c1_227 = arith.constant 1 : index
    %c3_228 = arith.constant 3 : index
    %c0_229 = arith.constant 0 : index
    %436 = vector.load %arg4[%c1_227, %c3_228, %c0_229] : memref<2x22x22xf32, #tpu.memory_space<vmem>>, vector<1x16x16xf32>
    %437 = vector.shape_cast %436 : vector<1x16x16xf32> to vector<16x16xf32>
    %438 = vector.broadcast %435 : f32 to vector<16x16xf32>
    %439 = arith.mulf %438, %437 : vector<16x16xf32>
    %440 = arith.addf %434, %439 : vector<16x16xf32>
    %c71 = arith.constant 71 : index
    %441 = memref.load %arg2[%c71] : memref<98xf32, #tpu.memory_space<smem>>
    %c1_230 = arith.constant 1 : index
    %c3_231 = arith.constant 3 : index
    %c1_232 = arith.constant 1 : index
    %442 = vector.load %arg4[%c1_230, %c3_231, %c1_232] : memref<2x22x22xf32, #tpu.memory_space<vmem>>, vector<1x16x16xf32>
    %443 = vector.shape_cast %442 : vector<1x16x16xf32> to vector<16x16xf32>
    %444 = vector.broadcast %441 : f32 to vector<16x16xf32>
    %445 = arith.mulf %444, %443 : vector<16x16xf32>
    %446 = arith.addf %440, %445 : vector<16x16xf32>
    %c72 = arith.constant 72 : index
    %447 = memref.load %arg2[%c72] : memref<98xf32, #tpu.memory_space<smem>>
    %c1_233 = arith.constant 1 : index
    %c3_234 = arith.constant 3 : index
    %c2_235 = arith.constant 2 : index
    %448 = vector.load %arg4[%c1_233, %c3_234, %c2_235] : memref<2x22x22xf32, #tpu.memory_space<vmem>>, vector<1x16x16xf32>
    %449 = vector.shape_cast %448 : vector<1x16x16xf32> to vector<16x16xf32>
    %450 = vector.broadcast %447 : f32 to vector<16x16xf32>
    %451 = arith.mulf %450, %449 : vector<16x16xf32>
    %452 = arith.addf %446, %451 : vector<16x16xf32>
    %c73 = arith.constant 73 : index
    %453 = memref.load %arg2[%c73] : memref<98xf32, #tpu.memory_space<smem>>
    %c1_236 = arith.constant 1 : index
    %c3_237 = arith.constant 3 : index
    %c3_238 = arith.constant 3 : index
    %454 = vector.load %arg4[%c1_236, %c3_237, %c3_238] : memref<2x22x22xf32, #tpu.memory_space<vmem>>, vector<1x16x16xf32>
    %455 = vector.shape_cast %454 : vector<1x16x16xf32> to vector<16x16xf32>
    %456 = vector.broadcast %453 : f32 to vector<16x16xf32>
    %457 = arith.mulf %456, %455 : vector<16x16xf32>
    %458 = arith.addf %452, %457 : vector<16x16xf32>
    %c74 = arith.constant 74 : index
    %459 = memref.load %arg2[%c74] : memref<98xf32, #tpu.memory_space<smem>>
    %c1_239 = arith.constant 1 : index
    %c3_240 = arith.constant 3 : index
    %c4_241 = arith.constant 4 : index
    %460 = vector.load %arg4[%c1_239, %c3_240, %c4_241] : memref<2x22x22xf32, #tpu.memory_space<vmem>>, vector<1x16x16xf32>
    %461 = vector.shape_cast %460 : vector<1x16x16xf32> to vector<16x16xf32>
    %462 = vector.broadcast %459 : f32 to vector<16x16xf32>
    %463 = arith.mulf %462, %461 : vector<16x16xf32>
    %464 = arith.addf %458, %463 : vector<16x16xf32>
    %c75 = arith.constant 75 : index
    %465 = memref.load %arg2[%c75] : memref<98xf32, #tpu.memory_space<smem>>
    %c1_242 = arith.constant 1 : index
    %c3_243 = arith.constant 3 : index
    %c5_244 = arith.constant 5 : index
    %466 = vector.load %arg4[%c1_242, %c3_243, %c5_244] : memref<2x22x22xf32, #tpu.memory_space<vmem>>, vector<1x16x16xf32>
    %467 = vector.shape_cast %466 : vector<1x16x16xf32> to vector<16x16xf32>
    %468 = vector.broadcast %465 : f32 to vector<16x16xf32>
    %469 = arith.mulf %468, %467 : vector<16x16xf32>
    %470 = arith.addf %464, %469 : vector<16x16xf32>
    %c76 = arith.constant 76 : index
    %471 = memref.load %arg2[%c76] : memref<98xf32, #tpu.memory_space<smem>>
    %c1_245 = arith.constant 1 : index
    %c3_246 = arith.constant 3 : index
    %c6_247 = arith.constant 6 : index
    %472 = vector.load %arg4[%c1_245, %c3_246, %c6_247] : memref<2x22x22xf32, #tpu.memory_space<vmem>>, vector<1x16x16xf32>
    %473 = vector.shape_cast %472 : vector<1x16x16xf32> to vector<16x16xf32>
    %474 = vector.broadcast %471 : f32 to vector<16x16xf32>
    %475 = arith.mulf %474, %473 : vector<16x16xf32>
    %476 = arith.addf %470, %475 : vector<16x16xf32>
    %c77 = arith.constant 77 : index
    %477 = memref.load %arg2[%c77] : memref<98xf32, #tpu.memory_space<smem>>
    %c1_248 = arith.constant 1 : index
    %c4_249 = arith.constant 4 : index
    %c0_250 = arith.constant 0 : index
    %478 = vector.load %arg4[%c1_248, %c4_249, %c0_250] : memref<2x22x22xf32, #tpu.memory_space<vmem>>, vector<1x16x16xf32>
    %479 = vector.shape_cast %478 : vector<1x16x16xf32> to vector<16x16xf32>
    %480 = vector.broadcast %477 : f32 to vector<16x16xf32>
    %481 = arith.mulf %480, %479 : vector<16x16xf32>
    %482 = arith.addf %476, %481 : vector<16x16xf32>
    %c78 = arith.constant 78 : index
    %483 = memref.load %arg2[%c78] : memref<98xf32, #tpu.memory_space<smem>>
    %c1_251 = arith.constant 1 : index
    %c4_252 = arith.constant 4 : index
    %c1_253 = arith.constant 1 : index
    %484 = vector.load %arg4[%c1_251, %c4_252, %c1_253] : memref<2x22x22xf32, #tpu.memory_space<vmem>>, vector<1x16x16xf32>
    %485 = vector.shape_cast %484 : vector<1x16x16xf32> to vector<16x16xf32>
    %486 = vector.broadcast %483 : f32 to vector<16x16xf32>
    %487 = arith.mulf %486, %485 : vector<16x16xf32>
    %488 = arith.addf %482, %487 : vector<16x16xf32>
    %c79 = arith.constant 79 : index
    %489 = memref.load %arg2[%c79] : memref<98xf32, #tpu.memory_space<smem>>
    %c1_254 = arith.constant 1 : index
    %c4_255 = arith.constant 4 : index
    %c2_256 = arith.constant 2 : index
    %490 = vector.load %arg4[%c1_254, %c4_255, %c2_256] : memref<2x22x22xf32, #tpu.memory_space<vmem>>, vector<1x16x16xf32>
    %491 = vector.shape_cast %490 : vector<1x16x16xf32> to vector<16x16xf32>
    %492 = vector.broadcast %489 : f32 to vector<16x16xf32>
    %493 = arith.mulf %492, %491 : vector<16x16xf32>
    %494 = arith.addf %488, %493 : vector<16x16xf32>
    %c80 = arith.constant 80 : index
    %495 = memref.load %arg2[%c80] : memref<98xf32, #tpu.memory_space<smem>>
    %c1_257 = arith.constant 1 : index
    %c4_258 = arith.constant 4 : index
    %c3_259 = arith.constant 3 : index
    %496 = vector.load %arg4[%c1_257, %c4_258, %c3_259] : memref<2x22x22xf32, #tpu.memory_space<vmem>>, vector<1x16x16xf32>
    %497 = vector.shape_cast %496 : vector<1x16x16xf32> to vector<16x16xf32>
    %498 = vector.broadcast %495 : f32 to vector<16x16xf32>
    %499 = arith.mulf %498, %497 : vector<16x16xf32>
    %500 = arith.addf %494, %499 : vector<16x16xf32>
    %c81 = arith.constant 81 : index
    %501 = memref.load %arg2[%c81] : memref<98xf32, #tpu.memory_space<smem>>
    %c1_260 = arith.constant 1 : index
    %c4_261 = arith.constant 4 : index
    %c4_262 = arith.constant 4 : index
    %502 = vector.load %arg4[%c1_260, %c4_261, %c4_262] : memref<2x22x22xf32, #tpu.memory_space<vmem>>, vector<1x16x16xf32>
    %503 = vector.shape_cast %502 : vector<1x16x16xf32> to vector<16x16xf32>
    %504 = vector.broadcast %501 : f32 to vector<16x16xf32>
    %505 = arith.mulf %504, %503 : vector<16x16xf32>
    %506 = arith.addf %500, %505 : vector<16x16xf32>
    %c82 = arith.constant 82 : index
    %507 = memref.load %arg2[%c82] : memref<98xf32, #tpu.memory_space<smem>>
    %c1_263 = arith.constant 1 : index
    %c4_264 = arith.constant 4 : index
    %c5_265 = arith.constant 5 : index
    %508 = vector.load %arg4[%c1_263, %c4_264, %c5_265] : memref<2x22x22xf32, #tpu.memory_space<vmem>>, vector<1x16x16xf32>
    %509 = vector.shape_cast %508 : vector<1x16x16xf32> to vector<16x16xf32>
    %510 = vector.broadcast %507 : f32 to vector<16x16xf32>
    %511 = arith.mulf %510, %509 : vector<16x16xf32>
    %512 = arith.addf %506, %511 : vector<16x16xf32>
    %c83 = arith.constant 83 : index
    %513 = memref.load %arg2[%c83] : memref<98xf32, #tpu.memory_space<smem>>
    %c1_266 = arith.constant 1 : index
    %c4_267 = arith.constant 4 : index
    %c6_268 = arith.constant 6 : index
    %514 = vector.load %arg4[%c1_266, %c4_267, %c6_268] : memref<2x22x22xf32, #tpu.memory_space<vmem>>, vector<1x16x16xf32>
    %515 = vector.shape_cast %514 : vector<1x16x16xf32> to vector<16x16xf32>
    %516 = vector.broadcast %513 : f32 to vector<16x16xf32>
    %517 = arith.mulf %516, %515 : vector<16x16xf32>
    %518 = arith.addf %512, %517 : vector<16x16xf32>
    %c84 = arith.constant 84 : index
    %519 = memref.load %arg2[%c84] : memref<98xf32, #tpu.memory_space<smem>>
    %c1_269 = arith.constant 1 : index
    %c5_270 = arith.constant 5 : index
    %c0_271 = arith.constant 0 : index
    %520 = vector.load %arg4[%c1_269, %c5_270, %c0_271] : memref<2x22x22xf32, #tpu.memory_space<vmem>>, vector<1x16x16xf32>
    %521 = vector.shape_cast %520 : vector<1x16x16xf32> to vector<16x16xf32>
    %522 = vector.broadcast %519 : f32 to vector<16x16xf32>
    %523 = arith.mulf %522, %521 : vector<16x16xf32>
    %524 = arith.addf %518, %523 : vector<16x16xf32>
    %c85 = arith.constant 85 : index
    %525 = memref.load %arg2[%c85] : memref<98xf32, #tpu.memory_space<smem>>
    %c1_272 = arith.constant 1 : index
    %c5_273 = arith.constant 5 : index
    %c1_274 = arith.constant 1 : index
    %526 = vector.load %arg4[%c1_272, %c5_273, %c1_274] : memref<2x22x22xf32, #tpu.memory_space<vmem>>, vector<1x16x16xf32>
    %527 = vector.shape_cast %526 : vector<1x16x16xf32> to vector<16x16xf32>
    %528 = vector.broadcast %525 : f32 to vector<16x16xf32>
    %529 = arith.mulf %528, %527 : vector<16x16xf32>
    %530 = arith.addf %524, %529 : vector<16x16xf32>
    %c86 = arith.constant 86 : index
    %531 = memref.load %arg2[%c86] : memref<98xf32, #tpu.memory_space<smem>>
    %c1_275 = arith.constant 1 : index
    %c5_276 = arith.constant 5 : index
    %c2_277 = arith.constant 2 : index
    %532 = vector.load %arg4[%c1_275, %c5_276, %c2_277] : memref<2x22x22xf32, #tpu.memory_space<vmem>>, vector<1x16x16xf32>
    %533 = vector.shape_cast %532 : vector<1x16x16xf32> to vector<16x16xf32>
    %534 = vector.broadcast %531 : f32 to vector<16x16xf32>
    %535 = arith.mulf %534, %533 : vector<16x16xf32>
    %536 = arith.addf %530, %535 : vector<16x16xf32>
    %c87 = arith.constant 87 : index
    %537 = memref.load %arg2[%c87] : memref<98xf32, #tpu.memory_space<smem>>
    %c1_278 = arith.constant 1 : index
    %c5_279 = arith.constant 5 : index
    %c3_280 = arith.constant 3 : index
    %538 = vector.load %arg4[%c1_278, %c5_279, %c3_280] : memref<2x22x22xf32, #tpu.memory_space<vmem>>, vector<1x16x16xf32>
    %539 = vector.shape_cast %538 : vector<1x16x16xf32> to vector<16x16xf32>
    %540 = vector.broadcast %537 : f32 to vector<16x16xf32>
    %541 = arith.mulf %540, %539 : vector<16x16xf32>
    %542 = arith.addf %536, %541 : vector<16x16xf32>
    %c88 = arith.constant 88 : index
    %543 = memref.load %arg2[%c88] : memref<98xf32, #tpu.memory_space<smem>>
    %c1_281 = arith.constant 1 : index
    %c5_282 = arith.constant 5 : index
    %c4_283 = arith.constant 4 : index
    %544 = vector.load %arg4[%c1_281, %c5_282, %c4_283] : memref<2x22x22xf32, #tpu.memory_space<vmem>>, vector<1x16x16xf32>
    %545 = vector.shape_cast %544 : vector<1x16x16xf32> to vector<16x16xf32>
    %546 = vector.broadcast %543 : f32 to vector<16x16xf32>
    %547 = arith.mulf %546, %545 : vector<16x16xf32>
    %548 = arith.addf %542, %547 : vector<16x16xf32>
    %c89 = arith.constant 89 : index
    %549 = memref.load %arg2[%c89] : memref<98xf32, #tpu.memory_space<smem>>
    %c1_284 = arith.constant 1 : index
    %c5_285 = arith.constant 5 : index
    %c5_286 = arith.constant 5 : index
    %550 = vector.load %arg4[%c1_284, %c5_285, %c5_286] : memref<2x22x22xf32, #tpu.memory_space<vmem>>, vector<1x16x16xf32>
    %551 = vector.shape_cast %550 : vector<1x16x16xf32> to vector<16x16xf32>
    %552 = vector.broadcast %549 : f32 to vector<16x16xf32>
    %553 = arith.mulf %552, %551 : vector<16x16xf32>
    %554 = arith.addf %548, %553 : vector<16x16xf32>
    %c90 = arith.constant 90 : index
    %555 = memref.load %arg2[%c90] : memref<98xf32, #tpu.memory_space<smem>>
    %c1_287 = arith.constant 1 : index
    %c5_288 = arith.constant 5 : index
    %c6_289 = arith.constant 6 : index
    %556 = vector.load %arg4[%c1_287, %c5_288, %c6_289] : memref<2x22x22xf32, #tpu.memory_space<vmem>>, vector<1x16x16xf32>
    %557 = vector.shape_cast %556 : vector<1x16x16xf32> to vector<16x16xf32>
    %558 = vector.broadcast %555 : f32 to vector<16x16xf32>
    %559 = arith.mulf %558, %557 : vector<16x16xf32>
    %560 = arith.addf %554, %559 : vector<16x16xf32>
    %c91 = arith.constant 91 : index
    %561 = memref.load %arg2[%c91] : memref<98xf32, #tpu.memory_space<smem>>
    %c1_290 = arith.constant 1 : index
    %c6_291 = arith.constant 6 : index
    %c0_292 = arith.constant 0 : index
    %562 = vector.load %arg4[%c1_290, %c6_291, %c0_292] : memref<2x22x22xf32, #tpu.memory_space<vmem>>, vector<1x16x16xf32>
    %563 = vector.shape_cast %562 : vector<1x16x16xf32> to vector<16x16xf32>
    %564 = vector.broadcast %561 : f32 to vector<16x16xf32>
    %565 = arith.mulf %564, %563 : vector<16x16xf32>
    %566 = arith.addf %560, %565 : vector<16x16xf32>
    %c92 = arith.constant 92 : index
    %567 = memref.load %arg2[%c92] : memref<98xf32, #tpu.memory_space<smem>>
    %c1_293 = arith.constant 1 : index
    %c6_294 = arith.constant 6 : index
    %c1_295 = arith.constant 1 : index
    %568 = vector.load %arg4[%c1_293, %c6_294, %c1_295] : memref<2x22x22xf32, #tpu.memory_space<vmem>>, vector<1x16x16xf32>
    %569 = vector.shape_cast %568 : vector<1x16x16xf32> to vector<16x16xf32>
    %570 = vector.broadcast %567 : f32 to vector<16x16xf32>
    %571 = arith.mulf %570, %569 : vector<16x16xf32>
    %572 = arith.addf %566, %571 : vector<16x16xf32>
    %c93 = arith.constant 93 : index
    %573 = memref.load %arg2[%c93] : memref<98xf32, #tpu.memory_space<smem>>
    %c1_296 = arith.constant 1 : index
    %c6_297 = arith.constant 6 : index
    %c2_298 = arith.constant 2 : index
    %574 = vector.load %arg4[%c1_296, %c6_297, %c2_298] : memref<2x22x22xf32, #tpu.memory_space<vmem>>, vector<1x16x16xf32>
    %575 = vector.shape_cast %574 : vector<1x16x16xf32> to vector<16x16xf32>
    %576 = vector.broadcast %573 : f32 to vector<16x16xf32>
    %577 = arith.mulf %576, %575 : vector<16x16xf32>
    %578 = arith.addf %572, %577 : vector<16x16xf32>
    %c94 = arith.constant 94 : index
    %579 = memref.load %arg2[%c94] : memref<98xf32, #tpu.memory_space<smem>>
    %c1_299 = arith.constant 1 : index
    %c6_300 = arith.constant 6 : index
    %c3_301 = arith.constant 3 : index
    %580 = vector.load %arg4[%c1_299, %c6_300, %c3_301] : memref<2x22x22xf32, #tpu.memory_space<vmem>>, vector<1x16x16xf32>
    %581 = vector.shape_cast %580 : vector<1x16x16xf32> to vector<16x16xf32>
    %582 = vector.broadcast %579 : f32 to vector<16x16xf32>
    %583 = arith.mulf %582, %581 : vector<16x16xf32>
    %584 = arith.addf %578, %583 : vector<16x16xf32>
    %c95 = arith.constant 95 : index
    %585 = memref.load %arg2[%c95] : memref<98xf32, #tpu.memory_space<smem>>
    %c1_302 = arith.constant 1 : index
    %c6_303 = arith.constant 6 : index
    %c4_304 = arith.constant 4 : index
    %586 = vector.load %arg4[%c1_302, %c6_303, %c4_304] : memref<2x22x22xf32, #tpu.memory_space<vmem>>, vector<1x16x16xf32>
    %587 = vector.shape_cast %586 : vector<1x16x16xf32> to vector<16x16xf32>
    %588 = vector.broadcast %585 : f32 to vector<16x16xf32>
    %589 = arith.mulf %588, %587 : vector<16x16xf32>
    %590 = arith.addf %584, %589 : vector<16x16xf32>
    %c96 = arith.constant 96 : index
    %591 = memref.load %arg2[%c96] : memref<98xf32, #tpu.memory_space<smem>>
    %c1_305 = arith.constant 1 : index
    %c6_306 = arith.constant 6 : index
    %c5_307 = arith.constant 5 : index
    %592 = vector.load %arg4[%c1_305, %c6_306, %c5_307] : memref<2x22x22xf32, #tpu.memory_space<vmem>>, vector<1x16x16xf32>
    %593 = vector.shape_cast %592 : vector<1x16x16xf32> to vector<16x16xf32>
    %594 = vector.broadcast %591 : f32 to vector<16x16xf32>
    %595 = arith.mulf %594, %593 : vector<16x16xf32>
    %596 = arith.addf %590, %595 : vector<16x16xf32>
    %c97 = arith.constant 97 : index
    %597 = memref.load %arg2[%c97] : memref<98xf32, #tpu.memory_space<smem>>
    %c1_308 = arith.constant 1 : index
    %c6_309 = arith.constant 6 : index
    %c6_310 = arith.constant 6 : index
    %598 = vector.load %arg4[%c1_308, %c6_309, %c6_310] : memref<2x22x22xf32, #tpu.memory_space<vmem>>, vector<1x16x16xf32>
    %599 = vector.shape_cast %598 : vector<1x16x16xf32> to vector<16x16xf32>
    %600 = vector.broadcast %597 : f32 to vector<16x16xf32>
    %601 = arith.mulf %600, %599 : vector<16x16xf32>
    %602 = arith.addf %596, %601 : vector<16x16xf32>
    %603 = arith.negf %602 : vector<16x16xf32>
    %604 = math.exp %603 : vector<16x16xf32>
    %cst_311 = arith.constant 1.000000e+00 : f32
    %605 = vector.broadcast %cst_311 : f32 to vector<16x16xf32>
    %606 = arith.addf %605, %604 : vector<16x16xf32>
    %607 = arith.divf %605, %606 : vector<16x16xf32>
    %c0_312 = arith.constant 0 : index
    %c0_313 = arith.constant 0 : index
    %c0_314 = arith.constant 0 : index
    %c0_315 = arith.constant 0 : index
    %608 = vector.load %arg3[%c0_312, %c0_313, %c0_314, %c0_315] : memref<1x1x16x16xf32, #tpu.memory_space<vmem>>, vector<1x1x16x16xf32>
    %609 = vector.shape_cast %608 : vector<1x1x16x16xf32> to vector<16x16xf32>
    %610 = vector.shape_cast %607 : vector<16x16xf32> to vector<1x1x16x16xf32>
    tpu.vector_store %arg3[%c0_312, %c0_313, %c0_314, %c0_315], %610 {strides = array<i32>} : memref<1x1x16x16xf32, #tpu.memory_space<vmem>>, vector<1x1x16x16xf32>,
    return
  }
  func.func @transform_0(%arg0: i32) -> (i32, i32, i32, i32) {
    %c0_i32 = arith.constant 0 : i32
    %c0_i32_0 = arith.constant 0 : i32
    %c0_i32_1 = arith.constant 0 : i32
    %c0_i32_2 = arith.constant 0 : i32
    return %arg0, %c0_i32, %c0_i32_0, %c0_i32_1 : i32, i32, i32, i32
  }
  func.func @transform_1(%arg0: i32) -> i32 {
    %c0_i32 = arith.constant 0 : i32
    %c0_i32_0 = arith.constant 0 : i32
    return %c0_i32 : i32
  }
  func.func @transform_2(%arg0: i32) -> (i32, i32, i32, i32) {
    %c0_i32 = arith.constant 0 : i32
    %c0_i32_0 = arith.constant 0 : i32
    %c0_i32_1 = arith.constant 0 : i32
    %c0_i32_2 = arith.constant 0 : i32
    return %arg0, %c0_i32, %c0_i32_0, %c0_i32_1 : i32, i32, i32, i32
  }
}

</mosaic_0001>

<llo_original>
// kernel: tpu_custom_call.1
$region0: #{tpu_custom_call.1}
  #allocation0 [shape = 'u32[]', space=smem, size = 0x4, offset = 0x4, fixed_abs, tag = 'smem constant byte address 0x4 - core index']
  #allocation1 [shape = 'u32[72,128]{1,0:T(1,128)}', space=vmem, size = 0x9000, scoped, tag = 'internal scratch']
  #allocation2 [shape = 'f32[2,22,22]{2,1,0:T(8,128)}', space=vmem, size = 0x6000, scoped, tag = 'scratch operand']
  %s0 = inlined_call_operand.hbm [shape: f32[2,4,16,16], index: 0, kind: input, shape index: {}]
  %s1 = inlined_call_operand.hbm [shape: f32[98], index: 1, kind: input, shape index: {}]
  %s2 = inlined_call_operand.hbm [shape: f32[2,1,16,16], index: 2, kind: output, shape index: {}]
  %s3 = sld [smem:[#allocation0]]
  $region49: #{tpu_custom_call.1} parent=0
    _
  %s5 = ssub.s32 1, %s3
  %s6 = scalar_select 0, %s5, %s3
  $region1: #{tpu_custom_call.1} parent=0
    #allocation3 [shape = 'u8[65536]{0}', space=vmem, size = 0x10000, scoped, tag = 'input window, operand 0']
    #allocation4 [shape = 's32[2]{0}', space=sflag, size = 0x8, scoped, tag = 'scoped memory for tpu_custom_call.1']
    #allocation5 [shape = 's32[2]{0}', space=sflag, size = 0x8, scoped, tag = 'scoped memory for tpu_custom_call.1']
    #allocation6 [shape = 's32[2]{0}', space=sflag, size = 0x8, scoped, tag = 'scoped memory for tpu_custom_call.1']
    #allocation7 [shape = 'u8[512]{0}', space=smem, size = 0x200, scoped, tag = 'input window, operand 1, single buffered']
    #allocation8 [shape = 'u8[16384]{0}', space=vmem, size = 0x4000, scoped, tag = 'output window, operand 0']
    %7 = vsyncpa [#allocation4], 0
    %s8 = scalar_lea.sflag [#allocation4], 1
    %9 = vsyncpa %s8, 0
    %10 = vsyncpa [#allocation6], 0
    %11 = vsyncpa [#allocation5], 0
    %s12 = scalar_lea.sflag [#allocation5], 1
    %13 = vsyncpa %s12, 0
    loop: start=0, step=1, limit=4
    $region2: #{tpu_custom_call.1} parent=1 // loop_pre_header
      _
    $region3: #{tpu_custom_call.1} parent=1 // loop_header
      %s15 = sphi 0, %s19
      %p16 = scmp.ge.s32.totalorder %s15, 4
      %s25 = sphi 0, %s27
      %s28 = sphi 0, %s25
      %s29 = sphi 0, %s28
      %s45 = sphi 0, %s29
      %s49 = sphi 0, %s49
      %s51 = sphi 0, %s49
      %s52 = sphi 0, %s51
      %s66 = sphi 0, %s52
      %s72 = sphi 0, %s74
      %s75 = sphi 0, %s72
      %s76 = sphi 0, %s75
      %s92 = sphi 0, %s76
    $region4: #{tpu_custom_call.1} parent=1 // loop_header_branch
      %18 = sbr.rel (%p16) target = $region8
    $region5: #{tpu_custom_call.1} parent=1 // loop_body
      %s20 = ssub.s32 %s15, 1
      %s21 = ssub.s32 %s15, 2
      %s22 = sadd.s32 %s15, 1
      %s23 = ssub.s32 %s15, %s22
      %p24 = scmp.eq.s32.totalorder %s23, 0
      %s26 = sadd.s32 %s25, 1
      %s27 = scalar_select %p24, %s25, %s26
      %p30 = pneg %p24
      %p31 = scmp.eq.s32.totalorder %s15, 1
      %p32 = por %p30, %p31
      %p33 = scmp.ne.s32.totalorder %s25, %s28
      %p34 = scmp.eq.s32.totalorder %s15, 0
      %p35 = por %p33, %p34
      %p36 = scmp.ne.s32.totalorder %s25, %s28
      %p37 = scmp.eq.s32.totalorder %s20, 1
      %p38 = por %p36, %p37
      %p39 = scmp.ne.s32.totalorder %s28, %s29
      %p40 = scmp.eq.s32.totalorder %s20, 0
      %p41 = por %p39, %p40
      %p42 = scmp.ne.s32.totalorder %s28, %s29
      %p43 = scmp.eq.s32.totalorder %s21, 1
      %p44 = por %p42, %p43
      %p46 = scmp.ne.s32.totalorder %s29, %s45
      %p47 = scmp.eq.s32.totalorder %s21, 0
      %p48 = por %p46, %p47
      %s50 = sadd.s32 %s49, 1
      %p53 = scmp.eq.s32.totalorder %s15, 1
      %p54 = scmp.ne.s32.totalorder %s49, %s51
      %p55 = scmp.eq.s32.totalorder %s15, 0
      %p56 = por %p54, %p55
      %p57 = scmp.ne.s32.totalorder %s49, %s51
      %p58 = scmp.eq.s32.totalorder %s20, 1
      %p59 = por %p57, %p58
      %p60 = scmp.ne.s32.totalorder %s51, %s52
      %p61 = scmp.eq.s32.totalorder %s20, 0
      %p62 = por %p60, %p61
      %p63 = scmp.ne.s32.totalorder %s51, %s52
      %p64 = scmp.eq.s32.totalorder %s21, 1
      %p65 = por %p63, %p64
      %p67 = scmp.ne.s32.totalorder %s52, %s66
      %p68 = scmp.eq.s32.totalorder %s21, 0
      %p69 = por %p67, %p68
      %s70 = ssub.s32 %s15, %s22
      %p71 = scmp.eq.s32.totalorder %s70, 0
      %s73 = sadd.s32 %s72, 1
      %s74 = scalar_select %p71, %s72, %s73
      %p77 = pneg %p71
      %p78 = scmp.eq.s32.totalorder %s15, 1
      %p79 = por %p77, %p78
      %p80 = scmp.ne.s32.totalorder %s72, %s75
      %p81 = scmp.eq.s32.totalorder %s15, 0
      %p82 = por %p80, %p81
      %p83 = scmp.ne.s32.totalorder %s72, %s75
      %p84 = scmp.eq.s32.totalorder %s20, 1
      %p85 = por %p83, %p84
      %p86 = scmp.ne.s32.totalorder %s75, %s76
      %p87 = scmp.eq.s32.totalorder %s20, 0
      %p88 = por %p86, %p87
      %p89 = scmp.ne.s32.totalorder %s75, %s76
      %p90 = scmp.eq.s32.totalorder %s21, 1
      %p91 = por %p89, %p90
      %p93 = scmp.ne.s32.totalorder %s76, %s92
      %p94 = scmp.eq.s32.totalorder %s21, 0
      %p95 = por %p93, %p94
      %p96 = scmp.le.s32.totalorder 1, %s15
      %p97 = scmp.lt.s32.totalorder %s15, 3
      %p98 = pnand %p96, %p97
      %p99 = pneg %p98
      // Predicated region
      $region9: #{tpu_custom_call.1} parent=5 // pred_check
        _
      $region10: #{tpu_custom_call.1} parent=5 // pred_check_branch
        %101 = sbr.rel (%p98) target = $region12
      $region11: #{tpu_custom_call.1} parent=5 // pred_region
        %s102 = ssub.s32 %s15, 1
        // Predicated region
        $region13: #{tpu_custom_call.1} parent=11 // pred_check
          %p103 = pneg %p62
        $region14: #{tpu_custom_call.1} parent=11 // pred_check_branch
          %105 = sbr.rel (%p103) target = $region16
        $region15: #{tpu_custom_call.1} parent=11 // pred_region
          %107 = vsyncadd [#allocation6], 0
          %s109 = sshll.u32 %s1, 4
          %s110 = int_to_ptr.hbm [resolvable:$true] %s109
          %112 = dma.hbm_to_smem %s110, 16, [#allocation7], [#allocation6]
        $region16: #{tpu_custom_call.1} parent=11 // pred_fallthru
          _
      $region12: #{tpu_custom_call.1} parent=5 // pred_fallthru
        _
      %p113 = scmp.lt.s32.totalorder %s15, 2
      // Predicated region
      $region17: #{tpu_custom_call.1} parent=5 // pred_check
        %p114 = pneg %p113
      $region18: #{tpu_custom_call.1} parent=5 // pred_check_branch
        %116 = sbr.rel (%p114) target = $region20
      $region19: #{tpu_custom_call.1} parent=5 // pred_region
        // Predicated region
        $region21: #{tpu_custom_call.1} parent=19 // pred_check
          %p117 = pneg %p35
        $region22: #{tpu_custom_call.1} parent=19 // pred_check_branch
          %119 = sbr.rel (%p117) target = $region24
        $region23: #{tpu_custom_call.1} parent=19 // pred_region
          %s120 = sand.u32 %s25, 1
          %s121 = scalar_lea.sflag [#allocation4], %s120
          %s122 = sand.u32 %s25, 1
          %s123 = smul.addr %s122, 64
          %s124 = scalar_lea.vmem [#allocation3], %s123
          %126 = vsyncadd %s121, 0
          %s127 = smul.addr %s15, 8
          %s128 = smul.addr %s127, 8
          %s129 = scalar_lea.hbm %s0, %s128
          %s130 = sshll.u32 %s129, 4
          %s131 = int_to_ptr.hbm [resolvable:$true] %s130
          %s132 = sshll.u32 %s124, 4
          %s133 = int_to_ptr.vmem [resolvable:$true] %s132
          %138 = dma.hbm_to_vmem [thread:$0]  %s131, 1024, %s133, %s121, 128, 128, 8
        $region24: #{tpu_custom_call.1} parent=19 // pred_fallthru
          _
      $region20: #{tpu_custom_call.1} parent=5 // pred_fallthru
        _
      %p139 = scmp.le.s32.totalorder 1, %s15
      %p140 = scmp.lt.s32.totalorder %s15, 3
      %p141 = pnand %p139, %p140
      %p142 = pneg %p141
      // Predicated region
      $region25: #{tpu_custom_call.1} parent=5 // pred_check
        _
      $region26: #{tpu_custom_call.1} parent=5 // pred_check_branch
        %144 = sbr.rel (%p141) target = $region28
      $region27: #{tpu_custom_call.1} parent=5 // pred_region
        %s145 = ssub.s32 %s15, 1
        %s146 = sand.u32 %s28, 1
        %s147 = scalar_lea.sflag [#allocation4], %s146
        %s148 = sand.u32 %s28, 1
        %s149 = smul.addr %s148, 64
        %s150 = scalar_lea.vmem [#allocation3], %s149
        // Predicated region
        $region29: #{tpu_custom_call.1} parent=27 // pred_check
          %p151 = pneg %p41
        $region30: #{tpu_custom_call.1} parent=27 // pred_check_branch
          %153 = sbr.rel (%p151) target = $region32
        $region31: #{tpu_custom_call.1} parent=27 // pred_region
          %155 = dma.done %s147, 1024
        $region32: #{tpu_custom_call.1} parent=27 // pred_fallthru
          _
        // Predicated region
        $region33: #{tpu_custom_call.1} parent=27 // pred_check
          %p156 = pneg %p62
        $region34: #{tpu_custom_call.1} parent=27 // pred_check_branch
          %158 = sbr.rel (%p156) target = $region36
        $region35: #{tpu_custom_call.1} parent=27 // pred_region
          %160 = dma.done [#allocation6], 16
        $region36: #{tpu_custom_call.1} parent=27 // pred_fallthru
          _
        %161 = sfence
        %s162 = sand.u32 %s28, 1
        %s163 = scalar_lea.sflag [#allocation4], %s162
        %s164 = sand.u32 %s28, 1
        %s165 = smul.addr %s164, 64
        %s166 = scalar_lea.vmem [#allocation3], %s165
        %p167 = pneg %p41
        %p168 = pneg %p38
        %p169 = pneg %p62
        %p170 = pneg %p59
        %p171 = pneg %p88
        %p172 = pneg %p85
        %s173 = sand.u32 %s75, 1
        %s174 = scalar_lea.sflag [#allocation5], %s173
        %s175 = sand.u32 %s75, 1
        %s176 = smul.addr %s175, 16
        %s177 = scalar_lea.vmem [#allocation8], %s176
        %v178 = vld [vmem:[%s150] sm:$0xff]
        %v179 = vld [vmem:[%s150 + $0x8] sm:$0xff]
        %v180 = vld [vmem:[%s150 + $0x10] sm:$0xff]
        %v181 = vld [vmem:[%s150 + $0x18] sm:$0xff]
        %v182 = vld [vmem:[%s150 + $0x20] sm:$0xff]
        %v183 = vld [vmem:[%s150 + $0x28] sm:$0xff]
        %v184 = vld [vmem:[%s150 + $0x30] sm:$0xff]
        %v185 = vld [vmem:[%s150 + $0x38] sm:$0xff]
        %vm186 = vcmask 130048
        %v187 = vsel %vm186, %v178, 0.0
        %v188 = vsel %vm186, %v180, 0.0
        %v189 = vadd.f32 %v187, %v188
        %v190 = vsel %vm186, %v182, 0.0
        %v191 = vadd.f32 %v189, %v190
        %v192 = vsel %vm186, %v184, 0.0
        %v193 = vadd.f32 %v191, %v192
        %v194 = vsel %vm186, %v179, 0.0
        %v195 = vsel %vm186, %v181, 0.0
        %v196 = vadd.f32 %v194, %v195
        %v197 = vsel %vm186, %v183, 0.0
        %v198 = vadd.f32 %v196, %v197
        %v199 = vsel %vm186, %v185, 0.0
        %v200 = vadd.f32 %v198, %v199
        %v201 = vrcp.pop 4.0
        %v202 = vmul.f32 4.0, %v201
        %v203 = vsub.f32 1.0, %v202
        %v204 = vmul.f32 %v201, %v203
        %v205 = vadd.f32 %v201, %v204
        %vm206 = vweird.f32 %v201
        %v207 = vsel %vm206, %v201, %v205
        %v208 = vmul.f32 %v193, %v207
        %v209 = vmul.f32 %v200, %v207
        %v210 = vsel %vm186, %v178, -inf
        %v211 = vsel %vm186, %v180, -inf
        %v212 = vsel %vm186, %v182, -inf
        %v213 = vmax.f32 %v210, %v212
        %v214 = vsel %vm186, %v184, -inf
        %v215 = vmax.f32 %v211, %v214
        %v216 = vmax.f32 %v213, %v215
        %v217 = vsel %vm186, %v179, -inf
        %v218 = vsel %vm186, %v181, -inf
        %v219 = vsel %vm186, %v183, -inf
        %v220 = vmax.f32 %v217, %v219
        %v221 = vsel %vm186, %v185, -inf
        %v222 = vmax.f32 %v218, %v221
        %v223 = vmax.f32 %v220, %v222
        %vm224 = vcmask 179200
        %225 = vst.msk [vmem:[#allocation2] sm:$0xff] %vm224, 0.0
        %226 = vst.msk [vmem:[#allocation2 + $0x8] sm:$0xff] %vm224, 0.0
        %vm227 = vcmask 177152
        %228 = vst.msk [vmem:[#allocation2 + $0x10] sm:$0x3f] %vm227, 0.0
        %229 = vst.msk [vmem:[#allocation2 + $0x18] sm:$0xff] %vm224, 0.0
        %230 = vst.msk [vmem:[#allocation2 + $0x20] sm:$0xff] %vm224, 0.0
        %231 = vst.msk [vmem:[#allocation2 + $0x28] sm:$0x3f] %vm227, 0.0
        %234 = vrot.lane.b32.xlu0 %v208, 3
        %v235 = vpop.permute.xlu0 %234
        %236 = vrot.lane.b32.xlu0 %v209, 3
        %v237 = vpop.permute.xlu0 %236
        %vm240 = vcmask 154648
        %241 = vst.msk [vmem:[#allocation2 + $0x3] sm:$0xff] %vm240, %v235
        %242 = vst.msk [vmem:[#allocation2 + $0xb] sm:$0xff] %vm240, %v237
        %245 = vrot.lane.b32.xlu0 %v216, 3
        %v246 = vpop.permute.xlu0 %245
        %247 = vrot.lane.b32.xlu0 %v223, 3
        %v248 = vpop.permute.xlu0 %247
        %s251 = scalar_lea.vmem [#allocation2], 24
        %252 = vst.msk [vmem:[%s251 + $0x3] sm:$0xff] %vm240, %v246
        %253 = vst.msk [vmem:[%s251 + $0xb] sm:$0xff] %vm240, %v248
        %s254 = sld [smem:[#allocation7]]
        %v255 = vld [vmem:[#allocation2] sm:$0xff]
        %v256 = vld [vmem:[#allocation2 + $0x8] sm:$0xff]
        %v257 = vstv %s254
        %v258 = vmul.f32 %v257, %v255
        %v259 = vmul.f32 %v257, %v256
        %v260 = vadd.f32 %v258, 0.0
        %v261 = vadd.f32 %v259, 0.0
        %s262 = sld [smem:[#allocation7 + $0x1]]
        %v263 = vstv %s262
        %v264 = vmul.f32 %v263, %v255
        %v265 = vmul.f32 %v263, %v256
        %268 = vrot.lane.b32.xlu0 %v264, 127
        %v269 = vpop.permute.xlu0 %268
        %270 = vrot.lane.b32.xlu0 %v265, 127
        %v271 = vpop.permute.xlu0 %270
        %v274 = vadd.f32 %v260, %v269
        %v275 = vadd.f32 %v261, %v271
        %s276 = sld [smem:[#allocation7 + $0x2]]
        %v277 = vstv %s276
        %v278 = vmul.f32 %v277, %v255
        %v279 = vmul.f32 %v277, %v256
        %282 = vrot.lane.b32.xlu0 %v278, 126
        %v283 = vpop.permute.xlu0 %282
        %284 = vrot.lane.b32.xlu0 %v279, 126
        %v285 = vpop.permute.xlu0 %284
        %v288 = vadd.f32 %v274, %v283
        %v289 = vadd.f32 %v275, %v285
        %s290 = sld [smem:[#allocation7 + $0x3]]
        %v291 = vstv %s290
        %v292 = vmul.f32 %v291, %v255
        %v293 = vmul.f32 %v291, %v256
        %296 = vrot.lane.b32.xlu0 %v292, 125
        %v297 = vpop.permute.xlu0 %296
        %298 = vrot.lane.b32.xlu0 %v293, 125
        %v299 = vpop.permute.xlu0 %298
        %v302 = vadd.f32 %v288, %v297
        %v303 = vadd.f32 %v289, %v299
        %s304 = sld [smem:[#allocation7 + $0x4]]
        %v305 = vstv %s304
        %v306 = vmul.f32 %v305, %v255
        %v307 = vmul.f32 %v305, %v256
        %310 = vrot.lane.b32.xlu0 %v306, 124
        %v311 = vpop.permute.xlu0 %310
        %312 = vrot.lane.b32.xlu0 %v307, 124
        %v313 = vpop.permute.xlu0 %312
        %v316 = vadd.f32 %v302, %v311
        %v317 = vadd.f32 %v303, %v313
        %s318 = sld [smem:[#allocation7 + $0x5]]
        %v319 = vstv %s318
        %v320 = vmul.f32 %v319, %v255
        %v321 = vmul.f32 %v319, %v256
        %324 = vrot.lane.b32.xlu0 %v320, 123
        %v325 = vpop.permute.xlu0 %324
        %326 = vrot.lane.b32.xlu0 %v321, 123
        %v327 = vpop.permute.xlu0 %326
        %v330 = vadd.f32 %v316, %v325
        %v331 = vadd.f32 %v317, %v327
        %s332 = sld [smem:[#allocation7 + $0x6]]
        %v333 = vstv %s332
        %v334 = vmul.f32 %v333, %v255
        %v335 = vmul.f32 %v333, %v256
        %338 = vrot.lane.b32.xlu0 %v334, 122
        %v339 = vpop.permute.xlu0 %338
        %340 = vrot.lane.b32.xlu0 %v335, 122
        %v341 = vpop.permute.xlu0 %340
        %v344 = vadd.f32 %v330, %v339
        %v345 = vadd.f32 %v331, %v341
        %s346 = sld [smem:[#allocation7 + $0x7]]
        %v347 = vld [vmem:[#allocation2 + $0x1] sm:$0xff]
        %v348 = vld [vmem:[#allocation2 + $0x9] sm:$0xff]
        %v349 = vstv %s346
        %v350 = vmul.f32 %v349, %v347
        %v351 = vmul.f32 %v349, %v348
        %v352 = vadd.f32 %v344, %v350
        %v353 = vadd.f32 %v345, %v351
        %s354 = sld [smem:[#allocation7 + $0x8]]
        %v355 = vstv %s354
        %v356 = vmul.f32 %v355, %v347
        %v357 = vmul.f32 %v355, %v348
        %360 = vrot.lane.b32.xlu0 %v356, 127
        %v361 = vpop.permute.xlu0 %360
        %362 = vrot.lane.b32.xlu0 %v357, 127
        %v363 = vpop.permute.xlu0 %362
        %v366 = vadd.f32 %v352, %v361
        %v367 = vadd.f32 %v353, %v363
        %s368 = sld [smem:[#allocation7 + $0x9]]
        %v369 = vstv %s368
        %v370 = vmul.f32 %v369, %v347
        %v371 = vmul.f32 %v369, %v348
        %374 = vrot.lane.b32.xlu0 %v370, 126
        %v375 = vpop.permute.xlu0 %374
        %376 = vrot.lane.b32.xlu0 %v371, 126
        %v377 = vpop.permute.xlu0 %376
        %v380 = vadd.f32 %v366, %v375
        %v381 = vadd.f32 %v367, %v377
        %s382 = sld [smem:[#allocation7 + $0xa]]
        %v383 = vstv %s382
        %v384 = vmul.f32 %v383, %v347
        %v385 = vmul.f32 %v383, %v348
        %388 = vrot.lane.b32.xlu0 %v384, 125
        %v389 = vpop.permute.xlu0 %388
        %390 = vrot.lane.b32.xlu0 %v385, 125
        %v391 = vpop.permute.xlu0 %390
        %v394 = vadd.f32 %v380, %v389
        %v395 = vadd.f32 %v381, %v391
        %s396 = sld [smem:[#allocation7 + $0xb]]
        %v397 = vstv %s396
        %v398 = vmul.f32 %v397, %v347
        %v399 = vmul.f32 %v397, %v348
        %402 = vrot.lane.b32.xlu0 %v398, 124
        %v403 = vpop.permute.xlu0 %402
        %404 = vrot.lane.b32.xlu0 %v399, 124
        %v405 = vpop.permute.xlu0 %404
        %v408 = vadd.f32 %v394, %v403
        %v409 = vadd.f32 %v395, %v405
        %s410 = sld [smem:[#allocation7 + $0xc]]
        %v411 = vstv %s410
        %v412 = vmul.f32 %v411, %v347
        %v413 = vmul.f32 %v411, %v348
        %416 = vrot.lane.b32.xlu0 %v412, 123
        %v417 = vpop.permute.xlu0 %416
        %418 = vrot.lane.b32.xlu0 %v413, 123
        %v419 = vpop.permute.xlu0 %418
        %v422 = vadd.f32 %v408, %v417
        %v423 = vadd.f32 %v409, %v419
        %s424 = sld [smem:[#allocation7 + $0xd]]
        %v425 = vstv %s424
        %v426 = vmul.f32 %v425, %v347
        %v427 = vmul.f32 %v425, %v348
        %430 = vrot.lane.b32.xlu0 %v426, 122
        %v431 = vpop.permute.xlu0 %430
        %432 = vrot.lane.b32.xlu0 %v427, 122
        %v433 = vpop.permute.xlu0 %432
        %v436 = vadd.f32 %v422, %v431
        %v437 = vadd.f32 %v423, %v433
        %s438 = sld [smem:[#allocation7 + $0xe]]
        %v439 = vld [vmem:[#allocation2 + $0x2] sm:$0xff]
        %v440 = vld [vmem:[#allocation2 + $0xa] sm:$0xff]
        %v441 = vstv %s438
        %v442 = vmul.f32 %v441, %v439
        %v443 = vmul.f32 %v441, %v440
        %v444 = vadd.f32 %v436, %v442
        %v445 = vadd.f32 %v437, %v443
        %s446 = sld [smem:[#allocation7 + $0xf]]
        %v447 = vstv %s446
        %v448 = vmul.f32 %v447, %v439
        %v449 = vmul.f32 %v447, %v440
        %452 = vrot.lane.b32.xlu0 %v448, 127
        %v453 = vpop.permute.xlu0 %452
        %454 = vrot.lane.b32.xlu0 %v449, 127
        %v455 = vpop.permute.xlu0 %454
        %v458 = vadd.f32 %v444, %v453
        %v459 = vadd.f32 %v445, %v455
        %s460 = sld [smem:[#allocation7 + $0x10]]
        %v461 = vstv %s460
        %v462 = vmul.f32 %v461, %v439
        %v463 = vmul.f32 %v461, %v440
        %466 = vrot.lane.b32.xlu0 %v462, 126
        %v467 = vpop.permute.xlu0 %466
        %468 = vrot.lane.b32.xlu0 %v463, 126
        %v469 = vpop.permute.xlu0 %468
        %v472 = vadd.f32 %v458, %v467
        %v473 = vadd.f32 %v459, %v469
        %s474 = sld [smem:[#allocation7 + $0x11]]
        %v475 = vstv %s474
        %v476 = vmul.f32 %v475, %v439
        %v477 = vmul.f32 %v475, %v440
        %480 = vrot.lane.b32.xlu0 %v476, 125
        %v481 = vpop.permute.xlu0 %480
        %482 = vrot.lane.b32.xlu0 %v477, 125
        %v483 = vpop.permute.xlu0 %482
        %v486 = vadd.f32 %v472, %v481
        %v487 = vadd.f32 %v473, %v483
        %s488 = sld [smem:[#allocation7 + $0x12]]
        %v489 = vstv %s488
        %v490 = vmul.f32 %v489, %v439
        %v491 = vmul.f32 %v489, %v440
        %494 = vrot.lane.b32.xlu0 %v490, 124
        %v495 = vpop.permute.xlu0 %494
        %496 = vrot.lane.b32.xlu0 %v491, 124
        %v497 = vpop.permute.xlu0 %496
        %v500 = vadd.f32 %v486, %v495
        %v501 = vadd.f32 %v487, %v497
        %s502 = sld [smem:[#allocation7 + $0x13]]
        %v503 = vstv %s502
        %v504 = vmul.f32 %v503, %v439
        %v505 = vmul.f32 %v503, %v440
        %508 = vrot.lane.b32.xlu0 %v504, 123
        %v509 = vpop.permute.xlu0 %508
        %510 = vrot.lane.b32.xlu0 %v505, 123
        %v511 = vpop.permute.xlu0 %510
        %v514 = vadd.f32 %v500, %v509
        %v515 = vadd.f32 %v501, %v511
        %s516 = sld [smem:[#allocation7 + $0x14]]
        %v517 = vstv %s516
        %v518 = vmul.f32 %v517, %v439
        %v519 = vmul.f32 %v517, %v440
        %522 = vrot.lane.b32.xlu0 %v518, 122
        %v523 = vpop.permute.xlu0 %522
        %524 = vrot.lane.b32.xlu0 %v519, 122
        %v525 = vpop.permute.xlu0 %524
        %v528 = vadd.f32 %v514, %v523
        %v529 = vadd.f32 %v515, %v525
        %s530 = sld [smem:[#allocation7 + $0x15]]
        %v531 = vld [vmem:[#allocation2 + $0x3] sm:$0xff]
        %v532 = vld [vmem:[#allocation2 + $0xb] sm:$0xff]
        %v533 = vstv %s530
        %v534 = vmul.f32 %v533, %v531
        %v535 = vmul.f32 %v533, %v532
        %v536 = vadd.f32 %v528, %v534
        %v537 = vadd.f32 %v529, %v535
        %s538 = sld [smem:[#allocation7 + $0x16]]
        %v539 = vstv %s538
        %v540 = vmul.f32 %v539, %v531
        %v541 = vmul.f32 %v539, %v532
        %544 = vrot.lane.b32.xlu0 %v540, 127
        %v545 = vpop.permute.xlu0 %544
        %546 = vrot.lane.b32.xlu0 %v541, 127
        %v547 = vpop.permute.xlu0 %546
        %v550 = vadd.f32 %v536, %v545
        %v551 = vadd.f32 %v537, %v547
        %s552 = sld [smem:[#allocation7 + $0x17]]
        %v553 = vstv %s552
        %v554 = vmul.f32 %v553, %v531
        %v555 = vmul.f32 %v553, %v532
        %558 = vrot.lane.b32.xlu0 %v554, 126
        %v559 = vpop.permute.xlu0 %558
        %560 = vrot.lane.b32.xlu0 %v555, 126
        %v561 = vpop.permute.xlu0 %560
        %v564 = vadd.f32 %v550, %v559
        %v565 = vadd.f32 %v551, %v561
        %s566 = sld [smem:[#allocation7 + $0x18]]
        %v567 = vstv %s566
        %v568 = vmul.f32 %v567, %v531
        %v569 = vmul.f32 %v567, %v532
        %572 = vrot.lane.b32.xlu0 %v568, 125
        %v573 = vpop.permute.xlu0 %572
        %574 = vrot.lane.b32.xlu0 %v569, 125
        %v575 = vpop.permute.xlu0 %574
        %v578 = vadd.f32 %v564, %v573
        %v579 = vadd.f32 %v565, %v575
        %s580 = sld [smem:[#allocation7 + $0x19]]
        %v581 = vstv %s580
        %v582 = vmul.f32 %v581, %v531
        %v583 = vmul.f32 %v581, %v532
        %586 = vrot.lane.b32.xlu0 %v582, 124
        %v587 = vpop.permute.xlu0 %586
        %588 = vrot.lane.b32.xlu0 %v583, 124
        %v589 = vpop.permute.xlu0 %588
        %v592 = vadd.f32 %v578, %v587
        %v593 = vadd.f32 %v579, %v589
        %s594 = sld [smem:[#allocation7 + $0x1a]]
        %v595 = vstv %s594
        %v596 = vmul.f32 %v595, %v531
        %v597 = vmul.f32 %v595, %v532
        %600 = vrot.lane.b32.xlu0 %v596, 123
        %v601 = vpop.permute.xlu0 %600
        %602 = vrot.lane.b32.xlu0 %v597, 123
        %v603 = vpop.permute.xlu0 %602
        %v606 = vadd.f32 %v592, %v601
        %v607 = vadd.f32 %v593, %v603
        %s608 = sld [smem:[#allocation7 + $0x1b]]
        %v609 = vstv %s608
        %v610 = vmul.f32 %v609, %v531
        %v611 = vmul.f32 %v609, %v532
        %614 = vrot.lane.b32.xlu0 %v610, 122
        %v615 = vpop.permute.xlu0 %614
        %616 = vrot.lane.b32.xlu0 %v611, 122
        %v617 = vpop.permute.xlu0 %616
        %v620 = vadd.f32 %v606, %v615
        %v621 = vadd.f32 %v607, %v617
        %s622 = sld [smem:[#allocation7 + $0x1c]]
        %v623 = vld [vmem:[#allocation2 + $0x4] sm:$0xff]
        %v624 = vld [vmem:[#allocation2 + $0xc] sm:$0xff]
        %v625 = vstv %s622
        %v626 = vmul.f32 %v625, %v623
        %v627 = vmul.f32 %v625, %v624
        %v628 = vadd.f32 %v620, %v626
        %v629 = vadd.f32 %v621, %v627
        %s630 = sld [smem:[#allocation7 + $0x1d]]
        %v631 = vstv %s630
        %v632 = vmul.f32 %v631, %v623
        %v633 = vmul.f32 %v631, %v624
        %636 = vrot.lane.b32.xlu0 %v632, 127
        %v637 = vpop.permute.xlu0 %636
        %638 = vrot.lane.b32.xlu0 %v633, 127
        %v639 = vpop.permute.xlu0 %638
        %v642 = vadd.f32 %v628, %v637
        %v643 = vadd.f32 %v629, %v639
        %s644 = sld [smem:[#allocation7 + $0x1e]]
        %v645 = vstv %s644
        %v646 = vmul.f32 %v645, %v623
        %v647 = vmul.f32 %v645, %v624
        %650 = vrot.lane.b32.xlu0 %v646, 126
        %v651 = vpop.permute.xlu0 %650
        %652 = vrot.lane.b32.xlu0 %v647, 126
        %v653 = vpop.permute.xlu0 %652
        %v656 = vadd.f32 %v642, %v651
        %v657 = vadd.f32 %v643, %v653
        %s658 = sld [smem:[#allocation7 + $0x1f]]
        %v659 = vstv %s658
        %v660 = vmul.f32 %v659, %v623
        %v661 = vmul.f32 %v659, %v624
        %664 = vrot.lane.b32.xlu0 %v660, 125
        %v665 = vpop.permute.xlu0 %664
        %666 = vrot.lane.b32.xlu0 %v661, 125
        %v667 = vpop.permute.xlu0 %666
        %v670 = vadd.f32 %v656, %v665
        %v671 = vadd.f32 %v657, %v667
        %s672 = sld [smem:[#allocation7 + $0x20]]
        %v673 = vstv %s672
        %v674 = vmul.f32 %v673, %v623
        %v675 = vmul.f32 %v673, %v624
        %678 = vrot.lane.b32.xlu0 %v674, 124
        %v679 = vpop.permute.xlu0 %678
        %680 = vrot.lane.b32.xlu0 %v675, 124
        %v681 = vpop.permute.xlu0 %680
        %v684 = vadd.f32 %v670, %v679
        %v685 = vadd.f32 %v671, %v681
        %s686 = sld [smem:[#allocation7 + $0x21]]
        %v687 = vstv %s686
        %v688 = vmul.f32 %v687, %v623
        %v689 = vmul.f32 %v687, %v624
        %692 = vrot.lane.b32.xlu0 %v688, 123
        %v693 = vpop.permute.xlu0 %692
        %694 = vrot.lane.b32.xlu0 %v689, 123
        %v695 = vpop.permute.xlu0 %694
        %v698 = vadd.f32 %v684, %v693
        %v699 = vadd.f32 %v685, %v695
        %s700 = sld [smem:[#allocation7 + $0x22]]
        %v701 = vstv %s700
        %v702 = vmul.f32 %v701, %v623
        %v703 = vmul.f32 %v701, %v624
        %706 = vrot.lane.b32.xlu0 %v702, 122
        %v707 = vpop.permute.xlu0 %706
        %708 = vrot.lane.b32.xlu0 %v703, 122
        %v709 = vpop.permute.xlu0 %708
        %v712 = vadd.f32 %v698, %v707
        %v713 = vadd.f32 %v699, %v709
        %s714 = sld [smem:[#allocation7 + $0x23]]
        %v715 = vld [vmem:[#allocation2 + $0x5] sm:$0xff]
        %v716 = vld [vmem:[#allocation2 + $0xd] sm:$0xff]
        %v717 = vstv %s714
        %v718 = vmul.f32 %v717, %v715
        %v719 = vmul.f32 %v717, %v716
        %v720 = vadd.f32 %v712, %v718
        %v721 = vadd.f32 %v713, %v719
        %s722 = sld [smem:[#allocation7 + $0x24]]
        %v723 = vstv %s722
        %v724 = vmul.f32 %v723, %v715
        %v725 = vmul.f32 %v723, %v716
        %728 = vrot.lane.b32.xlu0 %v724, 127
        %v729 = vpop.permute.xlu0 %728
        %730 = vrot.lane.b32.xlu0 %v725, 127
        %v731 = vpop.permute.xlu0 %730
        %v734 = vadd.f32 %v720, %v729
        %v735 = vadd.f32 %v721, %v731
        %s736 = sld [smem:[#allocation7 + $0x25]]
        %v737 = vstv %s736
        %v738 = vmul.f32 %v737, %v715
        %v739 = vmul.f32 %v737, %v716
        %742 = vrot.lane.b32.xlu0 %v738, 126
        %v743 = vpop.permute.xlu0 %742
        %744 = vrot.lane.b32.xlu0 %v739, 126
        %v745 = vpop.permute.xlu0 %744
        %v748 = vadd.f32 %v734, %v743
        %v749 = vadd.f32 %v735, %v745
        %s750 = sld [smem:[#allocation7 + $0x26]]
        %v751 = vstv %s750
        %v752 = vmul.f32 %v751, %v715
        %v753 = vmul.f32 %v751, %v716
        %756 = vrot.lane.b32.xlu0 %v752, 125
        %v757 = vpop.permute.xlu0 %756
        %758 = vrot.lane.b32.xlu0 %v753, 125
        %v759 = vpop.permute.xlu0 %758
        %v762 = vadd.f32 %v748, %v757
        %v763 = vadd.f32 %v749, %v759
        %s764 = sld [smem:[#allocation7 + $0x27]]
        %v765 = vstv %s764
        %v766 = vmul.f32 %v765, %v715
        %v767 = vmul.f32 %v765, %v716
        %770 = vrot.lane.b32.xlu0 %v766, 124
        %v771 = vpop.permute.xlu0 %770
        %772 = vrot.lane.b32.xlu0 %v767, 124
        %v773 = vpop.permute.xlu0 %772
        %v776 = vadd.f32 %v762, %v771
        %v777 = vadd.f32 %v763, %v773
        %s778 = sld [smem:[#allocation7 + $0x28]]
        %v779 = vstv %s778
        %v780 = vmul.f32 %v779, %v715
        %v781 = vmul.f32 %v779, %v716
        %784 = vrot.lane.b32.xlu0 %v780, 123
        %v785 = vpop.permute.xlu0 %784
        %786 = vrot.lane.b32.xlu0 %v781, 123
        %v787 = vpop.permute.xlu0 %786
        %v790 = vadd.f32 %v776, %v785
        %v791 = vadd.f32 %v777, %v787
        %s792 = sld [smem:[#allocation7 + $0x29]]
        %v793 = vstv %s792
        %v794 = vmul.f32 %v793, %v715
        %v795 = vmul.f32 %v793, %v716
        %798 = vrot.lane.b32.xlu0 %v794, 122
        %v799 = vpop.permute.xlu0 %798
        %800 = vrot.lane.b32.xlu0 %v795, 122
        %v801 = vpop.permute.xlu0 %800
        %v804 = vadd.f32 %v790, %v799
        %v805 = vadd.f32 %v791, %v801
        %s806 = sld [smem:[#allocation7 + $0x2a]]
        %v807 = vld [vmem:[#allocation2 + $0x6] sm:$0xff]
        %v808 = vld [vmem:[#allocation2 + $0xe] sm:$0xff]
        %v809 = vstv %s806
        %v810 = vmul.f32 %v809, %v807
        %v811 = vmul.f32 %v809, %v808
        %v812 = vadd.f32 %v804, %v810
        %v813 = vadd.f32 %v805, %v811
        %s814 = sld [smem:[#allocation7 + $0x2b]]
        %v815 = vstv %s814
        %v816 = vmul.f32 %v815, %v807
        %v817 = vmul.f32 %v815, %v808
        %820 = vrot.lane.b32.xlu0 %v816, 127
        %v821 = vpop.permute.xlu0 %820
        %822 = vrot.lane.b32.xlu0 %v817, 127
        %v823 = vpop.permute.xlu0 %822
        %v826 = vadd.f32 %v812, %v821
        %v827 = vadd.f32 %v813, %v823
        %s828 = sld [smem:[#allocation7 + $0x2c]]
        %v829 = vstv %s828
        %v830 = vmul.f32 %v829, %v807
        %v831 = vmul.f32 %v829, %v808
        %834 = vrot.lane.b32.xlu0 %v830, 126
        %v835 = vpop.permute.xlu0 %834
        %836 = vrot.lane.b32.xlu0 %v831, 126
        %v837 = vpop.permute.xlu0 %836
        %v840 = vadd.f32 %v826, %v835
        %v841 = vadd.f32 %v827, %v837
        %s842 = sld [smem:[#allocation7 + $0x2d]]
        %v843 = vstv %s842
        %v844 = vmul.f32 %v843, %v807
        %v845 = vmul.f32 %v843, %v808
        %848 = vrot.lane.b32.xlu0 %v844, 125
        %v849 = vpop.permute.xlu0 %848
        %850 = vrot.lane.b32.xlu0 %v845, 125
        %v851 = vpop.permute.xlu0 %850
        %v854 = vadd.f32 %v840, %v849
        %v855 = vadd.f32 %v841, %v851
        %s856 = sld [smem:[#allocation7 + $0x2e]]
        %v857 = vstv %s856
        %v858 = vmul.f32 %v857, %v807
        %v859 = vmul.f32 %v857, %v808
        %862 = vrot.lane.b32.xlu0 %v858, 124
        %v863 = vpop.permute.xlu0 %862
        %864 = vrot.lane.b32.xlu0 %v859, 124
        %v865 = vpop.permute.xlu0 %864
        %v868 = vadd.f32 %v854, %v863
        %v869 = vadd.f32 %v855, %v865
        %s870 = sld [smem:[#allocation7 + $0x2f]]
        %v871 = vstv %s870
        %v872 = vmul.f32 %v871, %v807
        %v873 = vmul.f32 %v871, %v808
        %876 = vrot.lane.b32.xlu0 %v872, 123
        %v877 = vpop.permute.xlu0 %876
        %878 = vrot.lane.b32.xlu0 %v873, 123
        %v879 = vpop.permute.xlu0 %878
        %v882 = vadd.f32 %v868, %v877
        %v883 = vadd.f32 %v869, %v879
        %s884 = sld [smem:[#allocation7 + $0x30]]
        %v885 = vstv %s884
        %v886 = vmul.f32 %v885, %v807
        %v887 = vmul.f32 %v885, %v808
        %890 = vrot.lane.b32.xlu0 %v886, 122
        %v891 = vpop.permute.xlu0 %890
        %892 = vrot.lane.b32.xlu0 %v887, 122
        %v893 = vpop.permute.xlu0 %892
        %v896 = vadd.f32 %v882, %v891
        %v897 = vadd.f32 %v883, %v893
        %s898 = sld [smem:[#allocation7 + $0x31]]
        %v899 = vld [vmem:[%s251] sm:$0xff]
        %v900 = vld [vmem:[%s251 + $0x8] sm:$0xff]
        %v901 = vstv %s898
        %v902 = vmul.f32 %v901, %v899
        %v903 = vmul.f32 %v901, %v900
        %v904 = vadd.f32 %v896, %v902
        %v905 = vadd.f32 %v897, %v903
        %s906 = sld [smem:[#allocation7 + $0x32]]
        %v907 = vstv %s906
        %v908 = vmul.f32 %v907, %v899
        %v909 = vmul.f32 %v907, %v900
        %912 = vrot.lane.b32.xlu0 %v908, 127
        %v913 = vpop.permute.xlu0 %912
        %914 = vrot.lane.b32.xlu0 %v909, 127
        %v915 = vpop.permute.xlu0 %914
        %v918 = vadd.f32 %v904, %v913
        %v919 = vadd.f32 %v905, %v915
        %s920 = sld [smem:[#allocation7 + $0x33]]
        %v921 = vstv %s920
        %v922 = vmul.f32 %v921, %v899
        %v923 = vmul.f32 %v921, %v900
        %926 = vrot.lane.b32.xlu0 %v922, 126
        %v927 = vpop.permute.xlu0 %926
        %928 = vrot.lane.b32.xlu0 %v923, 126
        %v929 = vpop.permute.xlu0 %928
        %v932 = vadd.f32 %v918, %v927
        %v933 = vadd.f32 %v919, %v929
        %s934 = sld [smem:[#allocation7 + $0x34]]
        %v935 = vstv %s934
        %v936 = vmul.f32 %v935, %v899
        %v937 = vmul.f32 %v935, %v900
        %940 = vrot.lane.b32.xlu0 %v936, 125
        %v941 = vpop.permute.xlu0 %940
        %942 = vrot.lane.b32.xlu0 %v937, 125
        %v943 = vpop.permute.xlu0 %942
        %v946 = vadd.f32 %v932, %v941
        %v947 = vadd.f32 %v933, %v943
        %s948 = sld [smem:[#allocation7 + $0x35]]
        %v949 = vstv %s948
        %v950 = vmul.f32 %v949, %v899
        %v951 = vmul.f32 %v949, %v900
        %954 = vrot.lane.b32.xlu0 %v950, 124
        %v955 = vpop.permute.xlu0 %954
        %956 = vrot.lane.b32.xlu0 %v951, 124
        %v957 = vpop.permute.xlu0 %956
        %v960 = vadd.f32 %v946, %v955
        %v961 = vadd.f32 %v947, %v957
        %s962 = sld [smem:[#allocation7 + $0x36]]
        %v963 = vstv %s962
        %v964 = vmul.f32 %v963, %v899
        %v965 = vmul.f32 %v963, %v900
        %968 = vrot.lane.b32.xlu0 %v964, 123
        %v969 = vpop.permute.xlu0 %968
        %970 = vrot.lane.b32.xlu0 %v965, 123
        %v971 = vpop.permute.xlu0 %970
        %v974 = vadd.f32 %v960, %v969
        %v975 = vadd.f32 %v961, %v971
        %s976 = sld [smem:[#allocation7 + $0x37]]
        %v977 = vstv %s976
        %v978 = vmul.f32 %v977, %v899
        %v979 = vmul.f32 %v977, %v900
        %982 = vrot.lane.b32.xlu0 %v978, 122
        %v983 = vpop.permute.xlu0 %982
        %984 = vrot.lane.b32.xlu0 %v979, 122
        %v985 = vpop.permute.xlu0 %984
        %v988 = vadd.f32 %v974, %v983
        %v989 = vadd.f32 %v975, %v985
        %s990 = sld [smem:[#allocation7 + $0x38]]
        %v991 = vld [vmem:[%s251 + $0x1] sm:$0xff]
        %v992 = vld [vmem:[%s251 + $0x9] sm:$0xff]
        %v993 = vstv %s990
        %v994 = vmul.f32 %v993, %v991
        %v995 = vmul.f32 %v993, %v992
        %v996 = vadd.f32 %v988, %v994
        %v997 = vadd.f32 %v989, %v995
        %s998 = sld [smem:[#allocation7 + $0x39]]
        %v999 = vstv %s998
        %v1000 = vmul.f32 %v999, %v991
        %v1001 = vmul.f32 %v999, %v992
        %1004 = vrot.lane.b32.xlu0 %v1000, 127
        %v1005 = vpop.permute.xlu0 %1004
        %1006 = vrot.lane.b32.xlu0 %v1001, 127
        %v1007 = vpop.permute.xlu0 %1006
        %v1010 = vadd.f32 %v996, %v1005
        %v1011 = vadd.f32 %v997, %v1007
        %s1012 = sld [smem:[#allocation7 + $0x3a]]
        %v1013 = vstv %s1012
        %v1014 = vmul.f32 %v1013, %v991
        %v1015 = vmul.f32 %v1013, %v992
        %1018 = vrot.lane.b32.xlu0 %v1014, 126
        %v1019 = vpop.permute.xlu0 %1018
        %1020 = vrot.lane.b32.xlu0 %v1015, 126
        %v1021 = vpop.permute.xlu0 %1020
        %v1024 = vadd.f32 %v1010, %v1019
        %v1025 = vadd.f32 %v1011, %v1021
        %s1026 = sld [smem:[#allocation7 + $0x3b]]
        %v1027 = vstv %s1026
        %v1028 = vmul.f32 %v1027, %v991
        %v1029 = vmul.f32 %v1027, %v992
        %1032 = vrot.lane.b32.xlu0 %v1028, 125
        %v1033 = vpop.permute.xlu0 %1032
        %1034 = vrot.lane.b32.xlu0 %v1029, 125
        %v1035 = vpop.permute.xlu0 %1034
        %v1038 = vadd.f32 %v1024, %v1033
        %v1039 = vadd.f32 %v1025, %v1035
        %s1040 = sld [smem:[#allocation7 + $0x3c]]
        %v1041 = vstv %s1040
        %v1042 = vmul.f32 %v1041, %v991
        %v1043 = vmul.f32 %v1041, %v992
        %1046 = vrot.lane.b32.xlu0 %v1042, 124
        %v1047 = vpop.permute.xlu0 %1046
        %1048 = vrot.lane.b32.xlu0 %v1043, 124
        %v1049 = vpop.permute.xlu0 %1048
        %v1052 = vadd.f32 %v1038, %v1047
        %v1053 = vadd.f32 %v1039, %v1049
        %s1054 = sld [smem:[#allocation7 + $0x3d]]
        %v1055 = vstv %s1054
        %v1056 = vmul.f32 %v1055, %v991
        %v1057 = vmul.f32 %v1055, %v992
        %1060 = vrot.lane.b32.xlu0 %v1056, 123
        %v1061 = vpop.permute.xlu0 %1060
        %1062 = vrot.lane.b32.xlu0 %v1057, 123
        %v1063 = vpop.permute.xlu0 %1062
        %v1066 = vadd.f32 %v1052, %v1061
        %v1067 = vadd.f32 %v1053, %v1063
        %s1068 = sld [smem:[#allocation7 + $0x3e]]
        %v1069 = vstv %s1068
        %v1070 = vmul.f32 %v1069, %v991
        %v1071 = vmul.f32 %v1069, %v992
        %1074 = vrot.lane.b32.xlu0 %v1070, 122
        %v1075 = vpop.permute.xlu0 %1074
        %1076 = vrot.lane.b32.xlu0 %v1071, 122
        %v1077 = vpop.permute.xlu0 %1076
        %v1080 = vadd.f32 %v1066, %v1075
        %v1081 = vadd.f32 %v1067, %v1077
        %s1082 = sld [smem:[#allocation7 + $0x3f]]
        %v1083 = vld [vmem:[%s251 + $0x2] sm:$0xff]
        %v1084 = vld [vmem:[%s251 + $0xa] sm:$0xff]
        %v1085 = vstv %s1082
        %v1086 = vmul.f32 %v1085, %v1083
        %v1087 = vmul.f32 %v1085, %v1084
        %v1088 = vadd.f32 %v1080, %v1086
        %v1089 = vadd.f32 %v1081, %v1087
        %s1090 = sld [smem:[#allocation7 + $0x40]]
        %v1091 = vstv %s1090
        %v1092 = vmul.f32 %v1091, %v1083
        %v1093 = vmul.f32 %v1091, %v1084
        %1096 = vrot.lane.b32.xlu0 %v1092, 127
        %v1097 = vpop.permute.xlu0 %1096
        %1098 = vrot.lane.b32.xlu0 %v1093, 127
        %v1099 = vpop.permute.xlu0 %1098
        %v1102 = vadd.f32 %v1088, %v1097
        %v1103 = vadd.f32 %v1089, %v1099
        %s1104 = sld [smem:[#allocation7 + $0x41]]
        %v1105 = vstv %s1104
        %v1106 = vmul.f32 %v1105, %v1083
        %v1107 = vmul.f32 %v1105, %v1084
        %1110 = vrot.lane.b32.xlu0 %v1106, 126
        %v1111 = vpop.permute.xlu0 %1110
        %1112 = vrot.lane.b32.xlu0 %v1107, 126
        %v1113 = vpop.permute.xlu0 %1112
        %v1116 = vadd.f32 %v1102, %v1111
        %v1117 = vadd.f32 %v1103, %v1113
        %s1118 = sld [smem:[#allocation7 + $0x42]]
        %v1119 = vstv %s1118
        %v1120 = vmul.f32 %v1119, %v1083
        %v1121 = vmul.f32 %v1119, %v1084
        %1124 = vrot.lane.b32.xlu0 %v1120, 125
        %v1125 = vpop.permute.xlu0 %1124
        %1126 = vrot.lane.b32.xlu0 %v1121, 125
        %v1127 = vpop.permute.xlu0 %1126
        %v1130 = vadd.f32 %v1116, %v1125
        %v1131 = vadd.f32 %v1117, %v1127
        %s1132 = sld [smem:[#allocation7 + $0x43]]
        %v1133 = vstv %s1132
        %v1134 = vmul.f32 %v1133, %v1083
        %v1135 = vmul.f32 %v1133, %v1084
        %1138 = vrot.lane.b32.xlu0 %v1134, 124
        %v1139 = vpop.permute.xlu0 %1138
        %1140 = vrot.lane.b32.xlu0 %v1135, 124
        %v1141 = vpop.permute.xlu0 %1140
        %v1144 = vadd.f32 %v1130, %v1139
        %v1145 = vadd.f32 %v1131, %v1141
        %s1146 = sld [smem:[#allocation7 + $0x44]]
        %v1147 = vstv %s1146
        %v1148 = vmul.f32 %v1147, %v1083
        %v1149 = vmul.f32 %v1147, %v1084
        %1152 = vrot.lane.b32.xlu0 %v1148, 123
        %v1153 = vpop.permute.xlu0 %1152
        %1154 = vrot.lane.b32.xlu0 %v1149, 123
        %v1155 = vpop.permute.xlu0 %1154
        %v1158 = vadd.f32 %v1144, %v1153
        %v1159 = vadd.f32 %v1145, %v1155
        %s1160 = sld [smem:[#allocation7 + $0x45]]
        %v1161 = vstv %s1160
        %v1162 = vmul.f32 %v1161, %v1083
        %v1163 = vmul.f32 %v1161, %v1084
        %1166 = vrot.lane.b32.xlu0 %v1162, 122
        %v1167 = vpop.permute.xlu0 %1166
        %1168 = vrot.lane.b32.xlu0 %v1163, 122
        %v1169 = vpop.permute.xlu0 %1168
        %v1172 = vadd.f32 %v1158, %v1167
        %v1173 = vadd.f32 %v1159, %v1169
        %s1174 = sld [smem:[#allocation7 + $0x46]]
        %v1175 = vld [vmem:[%s251 + $0x3] sm:$0xff]
        %v1176 = vld [vmem:[%s251 + $0xb] sm:$0xff]
        %v1177 = vstv %s1174
        %v1178 = vmul.f32 %v1177, %v1175
        %v1179 = vmul.f32 %v1177, %v1176
        %v1180 = vadd.f32 %v1172, %v1178
        %v1181 = vadd.f32 %v1173, %v1179
        %s1182 = sld [smem:[#allocation7 + $0x47]]
        %v1183 = vstv %s1182
        %v1184 = vmul.f32 %v1183, %v1175
        %v1185 = vmul.f32 %v1183, %v1176
        %1188 = vrot.lane.b32.xlu0 %v1184, 127
        %v1189 = vpop.permute.xlu0 %1188
        %1190 = vrot.lane.b32.xlu0 %v1185, 127
        %v1191 = vpop.permute.xlu0 %1190
        %v1194 = vadd.f32 %v1180, %v1189
        %v1195 = vadd.f32 %v1181, %v1191
        %s1196 = sld [smem:[#allocation7 + $0x48]]
        %v1197 = vstv %s1196
        %v1198 = vmul.f32 %v1197, %v1175
        %v1199 = vmul.f32 %v1197, %v1176
        %1202 = vrot.lane.b32.xlu0 %v1198, 126
        %v1203 = vpop.permute.xlu0 %1202
        %1204 = vrot.lane.b32.xlu0 %v1199, 126
        %v1205 = vpop.permute.xlu0 %1204
        %v1208 = vadd.f32 %v1194, %v1203
        %v1209 = vadd.f32 %v1195, %v1205
        %s1210 = sld [smem:[#allocation7 + $0x49]]
        %v1211 = vstv %s1210
        %v1212 = vmul.f32 %v1211, %v1175
        %v1213 = vmul.f32 %v1211, %v1176
        %1216 = vrot.lane.b32.xlu0 %v1212, 125
        %v1217 = vpop.permute.xlu0 %1216
        %1218 = vrot.lane.b32.xlu0 %v1213, 125
        %v1219 = vpop.permute.xlu0 %1218
        %v1222 = vadd.f32 %v1208, %v1217
        %v1223 = vadd.f32 %v1209, %v1219
        %s1224 = sld [smem:[#allocation7 + $0x4a]]
        %v1225 = vstv %s1224
        %v1226 = vmul.f32 %v1225, %v1175
        %v1227 = vmul.f32 %v1225, %v1176
        %1230 = vrot.lane.b32.xlu0 %v1226, 124
        %v1231 = vpop.permute.xlu0 %1230
        %1232 = vrot.lane.b32.xlu0 %v1227, 124
        %v1233 = vpop.permute.xlu0 %1232
        %v1236 = vadd.f32 %v1222, %v1231
        %v1237 = vadd.f32 %v1223, %v1233
        %s1238 = sld [smem:[#allocation7 + $0x4b]]
        %v1239 = vstv %s1238
        %v1240 = vmul.f32 %v1239, %v1175
        %v1241 = vmul.f32 %v1239, %v1176
        %1244 = vrot.lane.b32.xlu0 %v1240, 123
        %v1245 = vpop.permute.xlu0 %1244
        %1246 = vrot.lane.b32.xlu0 %v1241, 123
        %v1247 = vpop.permute.xlu0 %1246
        %v1250 = vadd.f32 %v1236, %v1245
        %v1251 = vadd.f32 %v1237, %v1247
        %s1252 = sld [smem:[#allocation7 + $0x4c]]
        %v1253 = vstv %s1252
        %v1254 = vmul.f32 %v1253, %v1175
        %v1255 = vmul.f32 %v1253, %v1176
        %1258 = vrot.lane.b32.xlu0 %v1254, 122
        %v1259 = vpop.permute.xlu0 %1258
        %1260 = vrot.lane.b32.xlu0 %v1255, 122
        %v1261 = vpop.permute.xlu0 %1260
        %v1264 = vadd.f32 %v1250, %v1259
        %v1265 = vadd.f32 %v1251, %v1261
        %s1266 = sld [smem:[#allocation7 + $0x4d]]
        %v1267 = vld [vmem:[%s251 + $0x4] sm:$0xff]
        %v1268 = vld [vmem:[%s251 + $0xc] sm:$0xff]
        %v1269 = vstv %s1266
        %v1270 = vmul.f32 %v1269, %v1267
        %v1271 = vmul.f32 %v1269, %v1268
        %v1272 = vadd.f32 %v1264, %v1270
        %v1273 = vadd.f32 %v1265, %v1271
        %s1274 = sld [smem:[#allocation7 + $0x4e]]
        %v1275 = vstv %s1274
        %v1276 = vmul.f32 %v1275, %v1267
        %v1277 = vmul.f32 %v1275, %v1268
        %1280 = vrot.lane.b32.xlu0 %v1276, 127
        %v1281 = vpop.permute.xlu0 %1280
        %1282 = vrot.lane.b32.xlu0 %v1277, 127
        %v1283 = vpop.permute.xlu0 %1282
        %v1286 = vadd.f32 %v1272, %v1281
        %v1287 = vadd.f32 %v1273, %v1283
        %s1288 = sld [smem:[#allocation7 + $0x4f]]
        %v1289 = vstv %s1288
        %v1290 = vmul.f32 %v1289, %v1267
        %v1291 = vmul.f32 %v1289, %v1268
        %1294 = vrot.lane.b32.xlu0 %v1290, 126
        %v1295 = vpop.permute.xlu0 %1294
        %1296 = vrot.lane.b32.xlu0 %v1291, 126
        %v1297 = vpop.permute.xlu0 %1296
        %v1300 = vadd.f32 %v1286, %v1295
        %v1301 = vadd.f32 %v1287, %v1297
        %s1302 = sld [smem:[#allocation7 + $0x50]]
        %v1303 = vstv %s1302
        %v1304 = vmul.f32 %v1303, %v1267
        %v1305 = vmul.f32 %v1303, %v1268
        %1308 = vrot.lane.b32.xlu0 %v1304, 125
        %v1309 = vpop.permute.xlu0 %1308
        %1310 = vrot.lane.b32.xlu0 %v1305, 125
        %v1311 = vpop.permute.xlu0 %1310
        %v1314 = vadd.f32 %v1300, %v1309
        %v1315 = vadd.f32 %v1301, %v1311
        %s1316 = sld [smem:[#allocation7 + $0x51]]
        %v1317 = vstv %s1316
        %v1318 = vmul.f32 %v1317, %v1267
        %v1319 = vmul.f32 %v1317, %v1268
        %1322 = vrot.lane.b32.xlu0 %v1318, 124
        %v1323 = vpop.permute.xlu0 %1322
        %1324 = vrot.lane.b32.xlu0 %v1319, 124
        %v1325 = vpop.permute.xlu0 %1324
        %v1328 = vadd.f32 %v1314, %v1323
        %v1329 = vadd.f32 %v1315, %v1325
        %s1330 = sld [smem:[#allocation7 + $0x52]]
        %v1331 = vstv %s1330
        %v1332 = vmul.f32 %v1331, %v1267
        %v1333 = vmul.f32 %v1331, %v1268
        %1336 = vrot.lane.b32.xlu0 %v1332, 123
        %v1337 = vpop.permute.xlu0 %1336
        %1338 = vrot.lane.b32.xlu0 %v1333, 123
        %v1339 = vpop.permute.xlu0 %1338
        %v1342 = vadd.f32 %v1328, %v1337
        %v1343 = vadd.f32 %v1329, %v1339
        %s1344 = sld [smem:[#allocation7 + $0x53]]
        %v1345 = vstv %s1344
        %v1346 = vmul.f32 %v1345, %v1267
        %v1347 = vmul.f32 %v1345, %v1268
        %1350 = vrot.lane.b32.xlu0 %v1346, 122
        %v1351 = vpop.permute.xlu0 %1350
        %1352 = vrot.lane.b32.xlu0 %v1347, 122
        %v1353 = vpop.permute.xlu0 %1352
        %v1356 = vadd.f32 %v1342, %v1351
        %v1357 = vadd.f32 %v1343, %v1353
        %s1358 = sld [smem:[#allocation7 + $0x54]]
        %v1359 = vld [vmem:[%s251 + $0x5] sm:$0xff]
        %v1360 = vld [vmem:[%s251 + $0xd] sm:$0xff]
        %v1361 = vstv %s1358
        %v1362 = vmul.f32 %v1361, %v1359
        %v1363 = vmul.f32 %v1361, %v1360
        %v1364 = vadd.f32 %v1356, %v1362
        %v1365 = vadd.f32 %v1357, %v1363
        %s1366 = sld [smem:[#allocation7 + $0x55]]
        %v1367 = vstv %s1366
        %v1368 = vmul.f32 %v1367, %v1359
        %v1369 = vmul.f32 %v1367, %v1360
        %1372 = vrot.lane.b32.xlu0 %v1368, 127
        %v1373 = vpop.permute.xlu0 %1372
        %1374 = vrot.lane.b32.xlu0 %v1369, 127
        %v1375 = vpop.permute.xlu0 %1374
        %v1378 = vadd.f32 %v1364, %v1373
        %v1379 = vadd.f32 %v1365, %v1375
        %s1380 = sld [smem:[#allocation7 + $0x56]]
        %v1381 = vstv %s1380
        %v1382 = vmul.f32 %v1381, %v1359
        %v1383 = vmul.f32 %v1381, %v1360
        %1386 = vrot.lane.b32.xlu0 %v1382, 126
        %v1387 = vpop.permute.xlu0 %1386
        %1388 = vrot.lane.b32.xlu0 %v1383, 126
        %v1389 = vpop.permute.xlu0 %1388
        %v1392 = vadd.f32 %v1378, %v1387
        %v1393 = vadd.f32 %v1379, %v1389
        %s1394 = sld [smem:[#allocation7 + $0x57]]
        %v1395 = vstv %s1394
        %v1396 = vmul.f32 %v1395, %v1359
        %v1397 = vmul.f32 %v1395, %v1360
        %1400 = vrot.lane.b32.xlu0 %v1396, 125
        %v1401 = vpop.permute.xlu0 %1400
        %1402 = vrot.lane.b32.xlu0 %v1397, 125
        %v1403 = vpop.permute.xlu0 %1402
        %v1406 = vadd.f32 %v1392, %v1401
        %v1407 = vadd.f32 %v1393, %v1403
        %s1408 = sld [smem:[#allocation7 + $0x58]]
        %v1409 = vstv %s1408
        %v1410 = vmul.f32 %v1409, %v1359
        %v1411 = vmul.f32 %v1409, %v1360
        %1414 = vrot.lane.b32.xlu0 %v1410, 124
        %v1415 = vpop.permute.xlu0 %1414
        %1416 = vrot.lane.b32.xlu0 %v1411, 124
        %v1417 = vpop.permute.xlu0 %1416
        %v1420 = vadd.f32 %v1406, %v1415
        %v1421 = vadd.f32 %v1407, %v1417
        %s1422 = sld [smem:[#allocation7 + $0x59]]
        %v1423 = vstv %s1422
        %v1424 = vmul.f32 %v1423, %v1359
        %v1425 = vmul.f32 %v1423, %v1360
        %1428 = vrot.lane.b32.xlu0 %v1424, 123
        %v1429 = vpop.permute.xlu0 %1428
        %1430 = vrot.lane.b32.xlu0 %v1425, 123
        %v1431 = vpop.permute.xlu0 %1430
        %v1434 = vadd.f32 %v1420, %v1429
        %v1435 = vadd.f32 %v1421, %v1431
        %s1436 = sld [smem:[#allocation7 + $0x5a]]
        %v1437 = vstv %s1436
        %v1438 = vmul.f32 %v1437, %v1359
        %v1439 = vmul.f32 %v1437, %v1360
        %1442 = vrot.lane.b32.xlu0 %v1438, 122
        %v1443 = vpop.permute.xlu0 %1442
        %1444 = vrot.lane.b32.xlu0 %v1439, 122
        %v1445 = vpop.permute.xlu0 %1444
        %v1448 = vadd.f32 %v1434, %v1443
        %v1449 = vadd.f32 %v1435, %v1445
        %s1450 = sld [smem:[#allocation7 + $0x5b]]
        %v1451 = vld [vmem:[%s251 + $0x6] sm:$0xff]
        %v1452 = vld [vmem:[%s251 + $0xe] sm:$0xff]
        %v1453 = vstv %s1450
        %v1454 = vmul.f32 %v1453, %v1451
        %v1455 = vmul.f32 %v1453, %v1452
        %v1456 = vadd.f32 %v1448, %v1454
        %v1457 = vadd.f32 %v1449, %v1455
        %s1458 = sld [smem:[#allocation7 + $0x5c]]
        %v1459 = vstv %s1458
        %v1460 = vmul.f32 %v1459, %v1451
        %v1461 = vmul.f32 %v1459, %v1452
        %1464 = vrot.lane.b32.xlu0 %v1460, 127
        %v1465 = vpop.permute.xlu0 %1464
        %1466 = vrot.lane.b32.xlu0 %v1461, 127
        %v1467 = vpop.permute.xlu0 %1466
        %v1470 = vadd.f32 %v1456, %v1465
        %v1471 = vadd.f32 %v1457, %v1467
        %s1472 = sld [smem:[#allocation7 + $0x5d]]
        %v1473 = vstv %s1472
        %v1474 = vmul.f32 %v1473, %v1451
        %v1475 = vmul.f32 %v1473, %v1452
        %1478 = vrot.lane.b32.xlu0 %v1474, 126
        %v1479 = vpop.permute.xlu0 %1478
        %1480 = vrot.lane.b32.xlu0 %v1475, 126
        %v1481 = vpop.permute.xlu0 %1480
        %v1484 = vadd.f32 %v1470, %v1479
        %v1485 = vadd.f32 %v1471, %v1481
        %s1486 = sld [smem:[#allocation7 + $0x5e]]
        %v1487 = vstv %s1486
        %v1488 = vmul.f32 %v1487, %v1451
        %v1489 = vmul.f32 %v1487, %v1452
        %1492 = vrot.lane.b32.xlu0 %v1488, 125
        %v1493 = vpop.permute.xlu0 %1492
        %1494 = vrot.lane.b32.xlu0 %v1489, 125
        %v1495 = vpop.permute.xlu0 %1494
        %v1498 = vadd.f32 %v1484, %v1493
        %v1499 = vadd.f32 %v1485, %v1495
        %s1500 = sld [smem:[#allocation7 + $0x5f]]
        %v1501 = vstv %s1500
        %v1502 = vmul.f32 %v1501, %v1451
        %v1503 = vmul.f32 %v1501, %v1452
        %1506 = vrot.lane.b32.xlu0 %v1502, 124
        %v1507 = vpop.permute.xlu0 %1506
        %1508 = vrot.lane.b32.xlu0 %v1503, 124
        %v1509 = vpop.permute.xlu0 %1508
        %v1512 = vadd.f32 %v1498, %v1507
        %v1513 = vadd.f32 %v1499, %v1509
        %s1514 = sld [smem:[#allocation7 + $0x60]]
        %v1515 = vstv %s1514
        %v1516 = vmul.f32 %v1515, %v1451
        %v1517 = vmul.f32 %v1515, %v1452
        %1520 = vrot.lane.b32.xlu0 %v1516, 123
        %v1521 = vpop.permute.xlu0 %1520
        %1522 = vrot.lane.b32.xlu0 %v1517, 123
        %v1523 = vpop.permute.xlu0 %1522
        %v1526 = vadd.f32 %v1512, %v1521
        %v1527 = vadd.f32 %v1513, %v1523
        %s1528 = sld [smem:[#allocation7 + $0x61]]
        %v1529 = vstv %s1528
        %v1530 = vmul.f32 %v1529, %v1451
        %v1531 = vmul.f32 %v1529, %v1452
        %1534 = vrot.lane.b32.xlu0 %v1530, 122
        %v1535 = vpop.permute.xlu0 %1534
        %1536 = vrot.lane.b32.xlu0 %v1531, 122
        %v1537 = vpop.permute.xlu0 %1536
        %v1540 = vadd.f32 %v1526, %v1535
        %v1541 = vadd.f32 %v1527, %v1537
        %v1542 = vxor.u32 %v1540, 2147483648
        %v1543 = vxor.u32 %v1541, 2147483648
        %v1544 = vmul.f32 %v1542, 1.442695
        %v1545 = vpow.pop %v1544
        %v1546 = vmul.f32 %v1543, 1.442695
        %v1547 = vpow.pop %v1546
        %v1548 = vadd.f32 %v1545, 1.0
        %v1549 = vadd.f32 %v1547, 1.0
        %v1550 = vrcp.pop %v1548
        %v1551 = vmul.f32 %v1548, %v1550
        %v1552 = vsub.f32 1.0, %v1551
        %v1553 = vmul.f32 %v1550, %v1552
        %v1554 = vadd.f32 %v1550, %v1553
        %vm1555 = vweird.f32 %v1548
        %vm1556 = vweird.f32 %v1550
        %vm1557 = vmor %vm1555, %vm1556
        %v1558 = vsel %vm1557, %v1550, %v1554
        %v1559 = vand.u32 2147483647, %v1548
        %vm1560 = vcmp.eq.f32.partialorder %v1559, 8.507059e+37
        %v1561 = vand.u32 %v1548, 2147483648
        %v1562 = vor.u32 1.1754944e-38, %v1561
        %v1563 = vsel %vm1560, %v1562, %v1558
        %v1564 = vmul.f32 1.0, %v1563
        %v1565 = vrcp.pop %v1549
        %v1566 = vmul.f32 %v1549, %v1565
        %v1567 = vsub.f32 1.0, %v1566
        %v1568 = vmul.f32 %v1565, %v1567
        %v1569 = vadd.f32 %v1565, %v1568
        %vm1570 = vweird.f32 %v1549
        %vm1571 = vweird.f32 %v1565
        %vm1572 = vmor %vm1570, %vm1571
        %v1573 = vsel %vm1572, %v1565, %v1569
        %v1574 = vand.u32 2147483647, %v1549
        %vm1575 = vcmp.eq.f32.partialorder %v1574, 8.507059e+37
        %v1576 = vand.u32 %v1549, 2147483648
        %v1577 = vor.u32 1.1754944e-38, %v1576
        %v1578 = vsel %vm1575, %v1577, %v1573
        %v1579 = vmul.f32 1.0, %v1578
        %1580 = vst.msk [vmem:[%s177] sm:$0xff] %vm186, %v1564
        %1581 = vst.msk [vmem:[%s177 + $0x8] sm:$0xff] %vm186, %v1579
        %s1582 = sand.u32 %s75, 1
        %s1583 = scalar_lea.sflag [#allocation5], %s1582
        %s1584 = sand.u32 %s75, 1
        %s1585 = smul.addr %s1584, 16
        %s1586 = scalar_lea.vmem [#allocation8], %s1585
        // Predicated region
        $region37: #{tpu_custom_call.1} parent=27 // pred_check
          %p1587 = pneg %p85
        $region38: #{tpu_custom_call.1} parent=27 // pred_check_branch
          %1589 = sbr.rel (%p1587) target = $region40
        $region39: #{tpu_custom_call.1} parent=27 // pred_region
          %1591 = vsyncadd %s1583, 0
          %s1592 = smul.addr %s20, 2
          %s1593 = smul.addr %s1592, 8
          %s1594 = scalar_lea.hbm %s2, %s1593
          %s1595 = sshll.u32 %s1586, 4
          %s1596 = int_to_ptr.vmem [resolvable:$true] %s1595
          %s1597 = sshll.u32 %s1594, 4
          %s1598 = int_to_ptr.hbm [resolvable:$true] %s1597
          %1603 = dma.vmem_to_hbm [thread:$0]  %s1596, 256, %s1598, %s1583, 128, 128, 8
        $region40: #{tpu_custom_call.1} parent=27 // pred_fallthru
          _
      $region28: #{tpu_custom_call.1} parent=5 // pred_fallthru
        _
      %p1604 = scmp.le.s32.totalorder 2, %s15
      // Predicated region
      $region41: #{tpu_custom_call.1} parent=5 // pred_check
        %p1605 = pneg %p1604
      $region42: #{tpu_custom_call.1} parent=5 // pred_check_branch
        %1607 = sbr.rel (%p1605) target = $region44
      $region43: #{tpu_custom_call.1} parent=5 // pred_region
        %s1608 = ssub.s32 %s15, 2
        // Predicated region
        $region45: #{tpu_custom_call.1} parent=43 // pred_check
          %p1609 = pneg %p91
        $region46: #{tpu_custom_call.1} parent=43 // pred_check_branch
          %1611 = sbr.rel (%p1609) target = $region48
        $region47: #{tpu_custom_call.1} parent=43 // pred_region
          %s1612 = sand.u32 %s76, 1
          %s1613 = scalar_lea.sflag [#allocation5], %s1612
          %s1614 = sand.u32 %s76, 1
          %s1615 = smul.addr %s1614, 16
          %s1616 = scalar_lea.vmem [#allocation8], %s1615
          %1618 = dma.done %s1613, 256
        $region48: #{tpu_custom_call.1} parent=43 // pred_fallthru
          _
      $region44: #{tpu_custom_call.1} parent=5 // pred_fallthru
        _
    $region6: #{tpu_custom_call.1} parent=1 // loop_footer
      %s19 = sadd.s32 1, %s15
    $region7: #{tpu_custom_call.1} parent=1 // loop_footer_branch
      %14 = sbr.rel target = $region3
    $region8: #{tpu_custom_call.1} parent=1 // loop_exit
      _
    %1619 = vsyncpa [#allocation4], 1
    %s1620 = scalar_lea.sflag [#allocation4], 1
    %1621 = vsyncpa %s1620, 1
    %1622 = vsyncpa [#allocation5], 1
    %s1623 = scalar_lea.sflag [#allocation5], 1
    %1624 = vsyncpa %s1623, 1
    %1625 = vsyncpa [#allocation6], 1
    %s1626 = scalar_lea.sflag [#allocation6], 1
    %1627 = vsyncpa %s1626, 1

</llo_original>
